<compile_context>
chip_gen: v6e
topology: v6e:2x2x1
jax: 0.10.0
libtpu: 0.0.40
codegen_flags: <defaults>
</compile_context>

<pallas_src>
import jax
import jax.numpy as jnp
from jax.experimental import pallas as pl
from jax.experimental.pallas import tpu as pltpu

H_DIM = 400
IN_DIM = 2


def discriminator_kernel(x_ref,
                         w1_ref, b1_ref,
                         w2_ref, b2_ref,
                         w3_ref, b3_ref,
                         w4_ref, b4_ref,
                         o_ref):
    # Entire 4-layer MLP fused into one kernel invocation per batch tile.
    x = x_ref[...]                                              # (TB, 2)
    w1 = w1_ref[...]                                            # (2, 400)

    # Layer 1 on the VPU: K=2 would be padded to the full MXU contraction
    # depth (128/256), so two broadcast multiply-adds are strictly better.
    h = x[:, 0:1] * w1[0:1, :] + x[:, 1:2] * w1[1:2, :] + b1_ref[...]
    h = jnp.maximum(h, 0.0)                                     # (TB, 400)

    # Layers 2 & 3: the real MXU work (400x400 each), f32 accumulation.
    h = jnp.dot(h, w2_ref[...], preferred_element_type=jnp.float32) + b2_ref[...]
    h = jnp.maximum(h, 0.0)                                     # (TB, 400)

    h = jnp.dot(h, w3_ref[...], preferred_element_type=jnp.float32) + b3_ref[...]
    h = jnp.maximum(h, 0.0)                                     # (TB, 400)

    logits = jnp.dot(h, w4_ref[...], preferred_element_type=jnp.float32) + b4_ref[...]
    o_ref[...] = jax.nn.sigmoid(logits)                         # (TB, 1)


def _pick_batch_tile(B):
    # Small batches: single grid step (everything resident, no pipeline
    # bookkeeping). Large batches: big MXU-filling tiles; grid length >= 2 also
    # lets dimension_semantics=("parallel",) shard across v7x's 2 TensorCores.
    if B <= 1024:
        return B
    for t in (1024, 512, 256, 128):
        if B % t == 0:
            return t
    return B  # fallback: one big tile (still correct)


def discriminator_forward(x, params, *, batch_tile=None):
    """x: (B, 2) float32 -> (B,) float32."""
    (w1, b1), (w2, b2), (w3, b3), (w4, b4) = params
    B = x.shape[0]
    if batch_tile is None:
        batch_tile = _pick_batch_tile(B)
    assert B % batch_tile == 0, "batch must be divisible by batch_tile"
    assert batch_tile == B or batch_tile % 8 == 0, "tile must be 8-aligned"
    grid = (B // batch_tile,)

    # Weights/biases are small (~1.3 MB total); constant index maps keep them
    # resident across grid steps (no re-DMA on repeated block indices).
    def full(shape):
        return pl.BlockSpec(shape, lambda i: (0, 0))

    param_bytes = sum(int(a.size) * a.dtype.itemsize
                      for a in (w1, b1, w2, b2, w3, b3, w4, b4))
    cost = pl.CostEstimate(
        flops=2 * B * (IN_DIM * H_DIM + H_DIM * H_DIM + H_DIM * H_DIM + H_DIM),
        transcendentals=B,  # sigmoid
        bytes_accessed=param_bytes + 4 * B * (IN_DIM + 1),
    )

    out = pl.pallas_call(
        discriminator_kernel,
        out_shape=jax.ShapeDtypeStruct((B, 1), jnp.float32),
        grid_spec=pltpu.PrefetchScalarGridSpec(
            num_scalar_prefetch=0,
            grid=grid,
            in_specs=[
                pl.BlockSpec((batch_tile, IN_DIM), lambda i: (i, 0)),  # x tile
                full(w1.shape), full(b1.shape),
                full(w2.shape), full(b2.shape),
                full(w3.shape), full(b3.shape),
                full(w4.shape), full(b4.shape),
            ],
            out_specs=pl.BlockSpec((batch_tile, 1), lambda i: (i, 0)),
        ),
        compiler_params=pltpu.CompilerParams(
            dimension_semantics=("parallel",),
            vmem_limit_bytes=32 * 1024 * 1024,
        ),
        cost_estimate=cost,
    )(x, w1, b1, w2, b2, w3, b3, w4, b4)

    return out.reshape(-1)   # matches PyTorch .view(-1)


def init_params(key):
    """Deterministic synthetic parameters with the module's shapes."""
    ks = jax.random.split(key, 8)
    def lin(kw, kb, fan_in, fan_out):
        # Uniform(-1/sqrt(fan_in), 1/sqrt(fan_in)), like nn.Linear default init.
        bound = 1.0 / jnp.sqrt(fan_in)
        w = jax.random.uniform(kw, (fan_in, fan_out), jnp.float32, -bound, bound)
        b = jax.random.uniform(kb, (1, fan_out), jnp.float32, -bound, bound)
        return w, b
    return (
        lin(ks[0], ks[1], IN_DIM, H_DIM),
        lin(ks[2], ks[3], H_DIM, H_DIM),
        lin(ks[4], ks[5], H_DIM, H_DIM),
        lin(ks[6], ks[7], H_DIM, 1),
    )


def reference_forward(x, params):
    (w1, b1), (w2, b2), (w3, b3), (w4, b4) = params
    h = jnp.maximum(x @ w1 + b1, 0.0)
    h = jnp.maximum(h @ w2 + b2, 0.0)
    h = jnp.maximum(h @ w3 + b3, 0.0)
    return jax.nn.sigmoid(h @ w4 + b4).reshape(-1)


if __name__ == "__main__":
    key = jax.random.PRNGKey(0)
    k_x, k_p = jax.random.split(key)

    B = 64
    x = jax.random.normal(k_x, (B, IN_DIM), dtype=jnp.float32)
    params = init_params(k_p)

    # Default tiling -> batch_tile = B = 64, grid = (1,): one fused invocation.
    out = discriminator_forward(x, params)
    out = jax.block_until_ready(out)

    ref = reference_forward(x, params)
    assert out.shape == (B,)
    assert jnp.allclose(out, ref, atol=1e-5, rtol=1e-5), "mismatch vs JAX reference"

    print("KERNEL_OK")
</pallas_src>

<mosaic_0001>
module attributes {stable_mosaic.version = 11 : i64} {
  func.func @discriminator_kernel(%arg0: i32, %arg1: memref<64x2xf32, #tpu.memory_space<vmem>>, %arg2: memref<2x400xf32, #tpu.memory_space<vmem>>, %arg3: memref<1x400xf32, #tpu.memory_space<vmem>>, %arg4: memref<400x400xf32, #tpu.memory_space<vmem>>, %arg5: memref<1x400xf32, #tpu.memory_space<vmem>>, %arg6: memref<400x400xf32, #tpu.memory_space<vmem>>, %arg7: memref<1x400xf32, #tpu.memory_space<vmem>>, %arg8: memref<400x1xf32, #tpu.memory_space<vmem>>, %arg9: memref<1x1xf32, #tpu.memory_space<vmem>>, %arg10: memref<64x1xf32, #tpu.memory_space<vmem>>) attributes {dimension_semantics = [#tpu.dimension_semantics<parallel>], iteration_bounds = array<i64: 1>, scalar_prefetch = 0 : i64, scratch_operands = 0 : i64, tpu.core_type = #tpu.core_type<tc>, window_params = [{transform_indices = @transform_0, window_bounds = array<i64: 64, 2>}, {pipeline_mode = #tpu.pipeline_mode<synchronous>, transform_indices = @transform_1, window_bounds = array<i64: 2, 400>}, {pipeline_mode = #tpu.pipeline_mode<synchronous>, transform_indices = @transform_2, window_bounds = array<i64: 1, 400>}, {pipeline_mode = #tpu.pipeline_mode<synchronous>, transform_indices = @transform_3, window_bounds = array<i64: 400, 400>}, {pipeline_mode = #tpu.pipeline_mode<synchronous>, transform_indices = @transform_4, window_bounds = array<i64: 1, 400>}, {pipeline_mode = #tpu.pipeline_mode<synchronous>, transform_indices = @transform_5, window_bounds = array<i64: 400, 400>}, {pipeline_mode = #tpu.pipeline_mode<synchronous>, transform_indices = @transform_6, window_bounds = array<i64: 1, 400>}, {pipeline_mode = #tpu.pipeline_mode<synchronous>, transform_indices = @transform_7, window_bounds = array<i64: 400, 1>}, {pipeline_mode = #tpu.pipeline_mode<synchronous>, transform_indices = @transform_8, window_bounds = array<i64: 1, 1>}, {transform_indices = @transform_9, window_bounds = array<i64: 64, 1>}]} {
    %c0 = arith.constant 0 : index
    %c0_0 = arith.constant 0 : index
    %0 = vector.load %arg1[%c0, %c0_0] : memref<64x2xf32, #tpu.memory_space<vmem>>, vector<64x2xf32>
    %c0_1 = arith.constant 0 : index
    %c0_2 = arith.constant 0 : index
    %1 = vector.load %arg2[%c0_1, %c0_2] : memref<2x400xf32, #tpu.memory_space<vmem>>, vector<2x400xf32>
    %2 = vector.extract_strided_slice %0 {offsets = [0, 0], sizes = [64, 1], strides = [1, 1]} : vector<64x2xf32> to vector<64x1xf32>
    %3 = vector.extract_strided_slice %1 {offsets = [0, 0], sizes = [1, 400], strides = [1, 1]} : vector<2x400xf32> to vector<1x400xf32>
    %4 = vector.broadcast %2 : vector<64x1xf32> to vector<64x400xf32>
    %5 = vector.broadcast %3 : vector<1x400xf32> to vector<64x400xf32>
    %6 = arith.mulf %4, %5 : vector<64x400xf32>
    %7 = vector.extract_strided_slice %0 {offsets = [0, 1], sizes = [64, 1], strides = [1, 1]} : vector<64x2xf32> to vector<64x1xf32>
    %8 = vector.extract_strided_slice %1 {offsets = [1, 0], sizes = [1, 400], strides = [1, 1]} : vector<2x400xf32> to vector<1x400xf32>
    %9 = vector.broadcast %7 : vector<64x1xf32> to vector<64x400xf32>
    %10 = vector.broadcast %8 : vector<1x400xf32> to vector<64x400xf32>
    %11 = arith.mulf %9, %10 : vector<64x400xf32>
    %12 = arith.addf %6, %11 : vector<64x400xf32>
    %c0_3 = arith.constant 0 : index
    %c0_4 = arith.constant 0 : index
    %13 = vector.load %arg3[%c0_3, %c0_4] : memref<1x400xf32, #tpu.memory_space<vmem>>, vector<1x400xf32>
    %14 = vector.broadcast %13 : vector<1x400xf32> to vector<64x400xf32>
    %15 = arith.addf %12, %14 : vector<64x400xf32>
    %cst = arith.constant 0.000000e+00 : f32
    %16 = vector.broadcast %cst : f32 to vector<64x400xf32>
    %17 = arith.maximumf %15, %16 : vector<64x400xf32>
    %c0_5 = arith.constant 0 : index
    %c0_6 = arith.constant 0 : index
    %18 = vector.load %arg4[%c0_5, %c0_6] : memref<400x400xf32, #tpu.memory_space<vmem>>, vector<400x400xf32>
    %cst_7 = arith.constant dense<0.000000e+00> : vector<64x400xf32>
    %19 = tpu.matmul %17, %18, %cst_7 {dimension_numbers = #tpu.dot_dimension_numbers<[1], [0], [0], [1], [0, 0, 1, 1], [], []>} : vector<64x400xf32>, vector<400x400xf32>, vector<64x400xf32> -> vector<64x400xf32>
    %c0_8 = arith.constant 0 : index
    %c0_9 = arith.constant 0 : index
    %20 = vector.load %arg5[%c0_8, %c0_9] : memref<1x400xf32, #tpu.memory_space<vmem>>, vector<1x400xf32>
    %21 = vector.broadcast %20 : vector<1x400xf32> to vector<64x400xf32>
    %22 = arith.addf %19, %21 : vector<64x400xf32>
    %cst_10 = arith.constant 0.000000e+00 : f32
    %23 = vector.broadcast %cst_10 : f32 to vector<64x400xf32>
    %24 = arith.maximumf %22, %23 : vector<64x400xf32>
    %c0_11 = arith.constant 0 : index
    %c0_12 = arith.constant 0 : index
    %25 = vector.load %arg6[%c0_11, %c0_12] : memref<400x400xf32, #tpu.memory_space<vmem>>, vector<400x400xf32>
    %cst_13 = arith.constant dense<0.000000e+00> : vector<64x400xf32>
    %26 = tpu.matmul %24, %25, %cst_13 {dimension_numbers = #tpu.dot_dimension_numbers<[1], [0], [0], [1], [0, 0, 1, 1], [], []>} : vector<64x400xf32>, vector<400x400xf32>, vector<64x400xf32> -> vector<64x400xf32>
    %c0_14 = arith.constant 0 : index
    %c0_15 = arith.constant 0 : index
    %27 = vector.load %arg7[%c0_14, %c0_15] : memref<1x400xf32, #tpu.memory_space<vmem>>, vector<1x400xf32>
    %28 = vector.broadcast %27 : vector<1x400xf32> to vector<64x400xf32>
    %29 = arith.addf %26, %28 : vector<64x400xf32>
    %cst_16 = arith.constant 0.000000e+00 : f32
    %30 = vector.broadcast %cst_16 : f32 to vector<64x400xf32>
    %31 = arith.maximumf %29, %30 : vector<64x400xf32>
    %c0_17 = arith.constant 0 : index
    %c0_18 = arith.constant 0 : index
    %32 = vector.load %arg8[%c0_17, %c0_18] : memref<400x1xf32, #tpu.memory_space<vmem>>, vector<400x1xf32>
    %cst_19 = arith.constant dense<0.000000e+00> : vector<64x1xf32>
    %33 = tpu.matmul %31, %32, %cst_19 {dimension_numbers = #tpu.dot_dimension_numbers<[1], [0], [0], [1], [0, 0, 1, 1], [], []>} : vector<64x400xf32>, vector<400x1xf32>, vector<64x1xf32> -> vector<64x1xf32>
    %c0_20 = arith.constant 0 : index
    %c0_21 = arith.constant 0 : index
    %34 = vector.load %arg9[%c0_20, %c0_21] : memref<1x1xf32, #tpu.memory_space<vmem>>, vector<1x1xf32>
    %35 = vector.broadcast %34 : vector<1x1xf32> to vector<64x1xf32>
    %36 = arith.addf %33, %35 : vector<64x1xf32>
    %37 = arith.negf %36 : vector<64x1xf32>
    %38 = math.exp %37 : vector<64x1xf32>
    %cst_22 = arith.constant 1.000000e+00 : f32
    %39 = vector.broadcast %cst_22 : f32 to vector<64x1xf32>
    %40 = arith.addf %39, %38 : vector<64x1xf32>
    %41 = arith.divf %39, %40 : vector<64x1xf32>
    %c0_23 = arith.constant 0 : index
    %c0_24 = arith.constant 0 : index
    %42 = vector.load %arg10[%c0_23, %c0_24] : memref<64x1xf32, #tpu.memory_space<vmem>>, vector<64x1xf32>
    tpu.vector_store %arg10[%c0_23, %c0_24], %41 {strides = array<i32>} : memref<64x1xf32, #tpu.memory_space<vmem>>, vector<64x1xf32>,
    return
  }
  func.func @transform_0(%arg0: i32) -> (i32, i32) {
    %c0_i32 = arith.constant 0 : i32
    %c0_i32_0 = arith.constant 0 : i32
    return %arg0, %c0_i32 : i32, i32
  }
  func.func @transform_1(%arg0: i32) -> (i32, i32) {
    %c0_i32 = arith.constant 0 : i32
    %c0_i32_0 = arith.constant 0 : i32
    %c0_i32_1 = arith.constant 0 : i32
    return %c0_i32, %c0_i32_0 : i32, i32
  }
  func.func @transform_2(%arg0: i32) -> (i32, i32) {
    %c0_i32 = arith.constant 0 : i32
    %c0_i32_0 = arith.constant 0 : i32
    %c0_i32_1 = arith.constant 0 : i32
    return %c0_i32, %c0_i32_0 : i32, i32
  }
  func.func @transform_3(%arg0: i32) -> (i32, i32) {
    %c0_i32 = arith.constant 0 : i32
    %c0_i32_0 = arith.constant 0 : i32
    %c0_i32_1 = arith.constant 0 : i32
    return %c0_i32, %c0_i32_0 : i32, i32
  }
  func.func @transform_4(%arg0: i32) -> (i32, i32) {
    %c0_i32 = arith.constant 0 : i32
    %c0_i32_0 = arith.constant 0 : i32
    %c0_i32_1 = arith.constant 0 : i32
    return %c0_i32, %c0_i32_0 : i32, i32
  }
  func.func @transform_5(%arg0: i32) -> (i32, i32) {
    %c0_i32 = arith.constant 0 : i32
    %c0_i32_0 = arith.constant 0 : i32
    %c0_i32_1 = arith.constant 0 : i32
    return %c0_i32, %c0_i32_0 : i32, i32
  }
  func.func @transform_6(%arg0: i32) -> (i32, i32) {
    %c0_i32 = arith.constant 0 : i32
    %c0_i32_0 = arith.constant 0 : i32
    %c0_i32_1 = arith.constant 0 : i32
    return %c0_i32, %c0_i32_0 : i32, i32
  }
  func.func @transform_7(%arg0: i32) -> (i32, i32) {
    %c0_i32 = arith.constant 0 : i32
    %c0_i32_0 = arith.constant 0 : i32
    %c0_i32_1 = arith.constant 0 : i32
    return %c0_i32, %c0_i32_0 : i32, i32
  }
  func.func @transform_8(%arg0: i32) -> (i32, i32) {
    %c0_i32 = arith.constant 0 : i32
    %c0_i32_0 = arith.constant 0 : i32
    %c0_i32_1 = arith.constant 0 : i32
    return %c0_i32, %c0_i32_0 : i32, i32
  }
  func.func @transform_9(%arg0: i32) -> (i32, i32) {
    %c0_i32 = arith.constant 0 : i32
    %c0_i32_0 = arith.constant 0 : i32
    return %arg0, %c0_i32 : i32, i32
  }
}

</mosaic_0001>

<llo_original>
// kernel: tpu_custom_call.1
$region0: #{tpu_custom_call.1}
  #allocation0 [shape = 'u32[]', space=smem, size = 0x4, offset = 0x4, fixed_abs, tag = 'smem constant byte address 0x4 - core index']
  #allocation1 [shape = 'u32[144,128]{1,0:T(1,128)}', space=vmem, size = 0x12000, scoped, tag = 'internal scratch']
  #allocation2 [shape = 'f32[1,1]{1,0:T(1,128)S(1)}', space=vmem, size = 0x200, scoped, tag = 'scoped memory for tpu_custom_call.1']
  %s0 = inlined_call_operand.vmem [shape: f32[64,2], index: 0, kind: input, shape index: {}]
  %s1 = inlined_call_operand.vmem [shape: f32[2,400], index: 1, kind: input, shape index: {}]
  %s2 = inlined_call_operand.vmem [shape: f32[1,400], index: 2, kind: input, shape index: {}]
  %s3 = inlined_call_operand.hbm [shape: f32[400,400], index: 3, kind: input, shape index: {}]
  %s4 = inlined_call_operand.vmem [shape: f32[1,400], index: 4, kind: input, shape index: {}]
  %s5 = inlined_call_operand.hbm [shape: f32[400,400], index: 5, kind: input, shape index: {}]
  %s6 = inlined_call_operand.vmem [shape: f32[1,400], index: 6, kind: input, shape index: {}]
  %s7 = inlined_call_operand.vmem [shape: f32[400,1], index: 7, kind: input, shape index: {}]
  %s8 = inlined_call_operand.<no memory space> [shape: f32[1,1], index: 8, kind: input, shape index: {}]
  %s9 = inlined_call_operand.vmem [shape: f32[64,1], index: 9, kind: output, shape index: {}]
  %s10 = sld [smem:[#allocation0]]
  $region54: #{tpu_custom_call.1} parent=0
    _
  %s12 = ssub.s32 1, %s10
  %s13 = scalar_select 0, %s12, %s10
  %v14 = vstv %s8
  %15 = vst [vmem:[#allocation2] sm:$0x1] %v14
  $region1: #{tpu_custom_call.1} parent=0
    #allocation3 [shape = 'u8[819200]{0}', space=vmem, size = 0xc8000, scoped, tag = 'input window, operand 3, single buffered']
    #allocation4 [shape = 's32[1]{0}', space=sflag, size = 0x4, scoped, tag = 'scoped memory for tpu_custom_call.1']
    #allocation5 [shape = 'u8[819200]{0}', space=vmem, size = 0xc8000, scoped, tag = 'input window, operand 5, single buffered']
    #allocation6 [shape = 's32[1]{0}', space=sflag, size = 0x4, scoped, tag = 'scoped memory for tpu_custom_call.1']
    %16 = vsyncpa [#allocation4], 0
    %17 = vsyncpa [#allocation6], 0
    // Predicated region
    $region2: #{tpu_custom_call.1} parent=1 // pred_check
      _
    $region3: #{tpu_custom_call.1} parent=1 // pred_check_branch
      %19 = sbr.rel (0) target = $region5
    $region4: #{tpu_custom_call.1} parent=1 // pred_region
      _
    $region5: #{tpu_custom_call.1} parent=1 // pred_fallthru
      _
    // Predicated region
    $region6: #{tpu_custom_call.1} parent=1 // pred_check
      _
    $region7: #{tpu_custom_call.1} parent=1 // pred_check_branch
      %21 = sbr.rel (0) target = $region9
    $region8: #{tpu_custom_call.1} parent=1 // pred_region
      _
    $region9: #{tpu_custom_call.1} parent=1 // pred_fallthru
      _
    // Predicated region
    $region10: #{tpu_custom_call.1} parent=1 // pred_check
      _
    $region11: #{tpu_custom_call.1} parent=1 // pred_check_branch
      %23 = sbr.rel (0) target = $region13
    $region12: #{tpu_custom_call.1} parent=1 // pred_region
      _
    $region13: #{tpu_custom_call.1} parent=1 // pred_fallthru
      _
    // Predicated region
    $region14: #{tpu_custom_call.1} parent=1 // pred_check
      _
    $region15: #{tpu_custom_call.1} parent=1 // pred_check_branch
      %25 = sbr.rel (0) target = $region17
    $region16: #{tpu_custom_call.1} parent=1 // pred_region
      %s27 = ssub.s32 25600, 25600
      %28 = vsyncadd [#allocation4], %s27
      %s29 = sshll.u32 [#allocation3], 4
      %s30 = int_to_ptr.vmem [resolvable:$true] %s29
      %35 = dma.hbm_to_vmem [thread:$0]  %s3, 25600, %s30, [#allocation4], 512, 512, 32
    $region17: #{tpu_custom_call.1} parent=1 // pred_fallthru
      _
    // Predicated region
    $region18: #{tpu_custom_call.1} parent=1 // pred_check
      _
    $region19: #{tpu_custom_call.1} parent=1 // pred_check_branch
      %37 = sbr.rel (0) target = $region21
    $region20: #{tpu_custom_call.1} parent=1 // pred_region
      _
    $region21: #{tpu_custom_call.1} parent=1 // pred_fallthru
      _
    // Predicated region
    $region22: #{tpu_custom_call.1} parent=1 // pred_check
      _
    $region23: #{tpu_custom_call.1} parent=1 // pred_check_branch
      %39 = sbr.rel (0) target = $region25
    $region24: #{tpu_custom_call.1} parent=1 // pred_region
      %s41 = ssub.s32 25600, 25600
      %42 = vsyncadd [#allocation6], %s41
      %s43 = sshll.u32 [#allocation5], 4
      %s44 = int_to_ptr.vmem [resolvable:$true] %s43
      %49 = dma.hbm_to_vmem [thread:$0]  %s5, 25600, %s44, [#allocation6], 512, 512, 32
    $region25: #{tpu_custom_call.1} parent=1 // pred_fallthru
      _
    // Predicated region
    $region26: #{tpu_custom_call.1} parent=1 // pred_check
      _
    $region27: #{tpu_custom_call.1} parent=1 // pred_check_branch
      %51 = sbr.rel (0) target = $region29
    $region28: #{tpu_custom_call.1} parent=1 // pred_region
      _
    $region29: #{tpu_custom_call.1} parent=1 // pred_fallthru
      _
    // Predicated region
    $region30: #{tpu_custom_call.1} parent=1 // pred_check
      _
    $region31: #{tpu_custom_call.1} parent=1 // pred_check_branch
      %53 = sbr.rel (0) target = $region33
    $region32: #{tpu_custom_call.1} parent=1 // pred_region
      _
    $region33: #{tpu_custom_call.1} parent=1 // pred_fallthru
      _
    // Predicated region
    $region34: #{tpu_custom_call.1} parent=1 // pred_check
      _
    $region35: #{tpu_custom_call.1} parent=1 // pred_check_branch
      %55 = sbr.rel (0) target = $region37
    $region36: #{tpu_custom_call.1} parent=1 // pred_region
      _
    $region37: #{tpu_custom_call.1} parent=1 // pred_fallthru
      _
    // Predicated region
    $region38: #{tpu_custom_call.1} parent=1 // pred_check
      _
    $region39: #{tpu_custom_call.1} parent=1 // pred_check_branch
      %57 = sbr.rel (0) target = $region41
    $region40: #{tpu_custom_call.1} parent=1 // pred_region
      %58 = dma.done [#allocation4], 25600
    $region41: #{tpu_custom_call.1} parent=1 // pred_fallthru
      _
    // Predicated region
    $region42: #{tpu_custom_call.1} parent=1 // pred_check
      _
    $region43: #{tpu_custom_call.1} parent=1 // pred_check_branch
      %60 = sbr.rel (0) target = $region45
    $region44: #{tpu_custom_call.1} parent=1 // pred_region
      %61 = dma.done [#allocation6], 25600
    $region45: #{tpu_custom_call.1} parent=1 // pred_fallthru
      _
    %v62 = vld [vmem:[%s0] sm:$0xff]
    %v63 = vld [vmem:[%s0 + $0x8] sm:$0xff]
    %v64 = vld [vmem:[%s0 + $0x10] sm:$0xff]
    %v65 = vld [vmem:[%s0 + $0x18] sm:$0xff]
    %v66 = vld [vmem:[%s0 + $0x20] sm:$0xff]
    %v67 = vld [vmem:[%s0 + $0x28] sm:$0xff]
    %v68 = vld [vmem:[%s0 + $0x30] sm:$0xff]
    %v69 = vld [vmem:[%s0 + $0x38] sm:$0xff]
    %v70 = vld [vmem:[%s1] sm:$0xff]
    %72 = vset.pattern.permute.xlu0 0
    %73 = vperm.xlu0 %72, %v62
    %v74 = vpop.permute.xlu0 %73
    %77 = vset.pattern.permute.xlu0 0
    %78 = vperm.xlu0 %77, %v63
    %v79 = vpop.permute.xlu0 %78
    %82 = vset.pattern.permute.xlu0 0
    %83 = vperm.xlu0 %82, %v64
    %v84 = vpop.permute.xlu0 %83
    %87 = vset.pattern.permute.xlu0 0
    %88 = vperm.xlu0 %87, %v65
    %v89 = vpop.permute.xlu0 %88
    %92 = vset.pattern.permute.xlu0 0
    %93 = vperm.xlu0 %92, %v66
    %v94 = vpop.permute.xlu0 %93
    %97 = vset.pattern.permute.xlu0 0
    %98 = vperm.xlu0 %97, %v67
    %v99 = vpop.permute.xlu0 %98
    %102 = vset.pattern.permute.xlu0 0
    %103 = vperm.xlu0 %102, %v68
    %v104 = vpop.permute.xlu0 %103
    %107 = vset.pattern.permute.xlu0 0
    %108 = vperm.xlu0 %107, %v69
    %v109 = vpop.permute.xlu0 %108
    %v112 = vlaneseq
    %v113 = vshrl.u32 %v112, 7
    %v114 = vsub.s32 0, %v113
    %v115 = vrot.slane %v70, %v114
    %v116 = vlaneseq
    %v117 = vshrl.u32 %v116, 7
    %v118 = vsub.s32 2, %v117
    %v119 = vrot.slane %v70, %v118
    %v120 = vlaneseq
    %v121 = vshrl.u32 %v120, 7
    %v122 = vsub.s32 4, %v121
    %v123 = vrot.slane %v70, %v122
    %v124 = vlaneseq
    %v125 = vshrl.u32 %v124, 7
    %v126 = vsub.s32 6, %v125
    %v127 = vrot.slane %v70, %v126
    %v132 = vlaneseq
    %v133 = vshrl.u32 %v132, 7
    %v134 = vsub.s32 0, %v133
    %v135 = vrot.slane %v115, %v134
    %v136 = vlaneseq
    %v137 = vshrl.u32 %v136, 7
    %v138 = vsub.s32 0, %v137
    %v139 = vrot.slane %v119, %v138
    %v140 = vlaneseq
    %v141 = vshrl.u32 %v140, 7
    %v142 = vsub.s32 0, %v141
    %v143 = vrot.slane %v123, %v142
    %v144 = vlaneseq
    %v145 = vshrl.u32 %v144, 7
    %v146 = vsub.s32 0, %v145
    %v147 = vrot.slane %v127, %v146
    %v148 = vmul.f32 %v74, %v135
    %v149 = vmul.f32 %v74, %v139
    %v150 = vmul.f32 %v74, %v143
    %v151 = vmul.f32 %v74, %v147
    %v152 = vmul.f32 %v79, %v135
    %v153 = vmul.f32 %v79, %v139
    %v154 = vmul.f32 %v79, %v143
    %v155 = vmul.f32 %v79, %v147
    %v156 = vmul.f32 %v84, %v135
    %v157 = vmul.f32 %v84, %v139
    %v158 = vmul.f32 %v84, %v143
    %v159 = vmul.f32 %v84, %v147
    %v160 = vmul.f32 %v89, %v135
    %v161 = vmul.f32 %v89, %v139
    %v162 = vmul.f32 %v89, %v143
    %v163 = vmul.f32 %v89, %v147
    %v164 = vmul.f32 %v94, %v135
    %v165 = vmul.f32 %v94, %v139
    %v166 = vmul.f32 %v94, %v143
    %v167 = vmul.f32 %v94, %v147
    %v168 = vmul.f32 %v99, %v135
    %v169 = vmul.f32 %v99, %v139
    %v170 = vmul.f32 %v99, %v143
    %v171 = vmul.f32 %v99, %v147
    %v172 = vmul.f32 %v104, %v135
    %v173 = vmul.f32 %v104, %v139
    %v174 = vmul.f32 %v104, %v143
    %v175 = vmul.f32 %v104, %v147
    %v176 = vmul.f32 %v109, %v135
    %v177 = vmul.f32 %v109, %v139
    %v178 = vmul.f32 %v109, %v143
    %v179 = vmul.f32 %v109, %v147
    %180 = vset.pattern.permute.xlu0 1
    %181 = vperm.xlu0 %180, %v62
    %v182 = vpop.permute.xlu0 %181
    %184 = vset.pattern.permute.xlu0 1
    %185 = vperm.xlu0 %184, %v63
    %v186 = vpop.permute.xlu0 %185
    %188 = vset.pattern.permute.xlu0 1
    %189 = vperm.xlu0 %188, %v64
    %v190 = vpop.permute.xlu0 %189
    %192 = vset.pattern.permute.xlu0 1
    %193 = vperm.xlu0 %192, %v65
    %v194 = vpop.permute.xlu0 %193
    %196 = vset.pattern.permute.xlu0 1
    %197 = vperm.xlu0 %196, %v66
    %v198 = vpop.permute.xlu0 %197
    %200 = vset.pattern.permute.xlu0 1
    %201 = vperm.xlu0 %200, %v67
    %v202 = vpop.permute.xlu0 %201
    %204 = vset.pattern.permute.xlu0 1
    %205 = vperm.xlu0 %204, %v68
    %v206 = vpop.permute.xlu0 %205
    %208 = vset.pattern.permute.xlu0 1
    %209 = vperm.xlu0 %208, %v69
    %v210 = vpop.permute.xlu0 %209
    %v212 = vlaneseq
    %v213 = vshrl.u32 %v212, 7
    %v214 = vsub.s32 1, %v213
    %v215 = vrot.slane %v70, %v214
    %v216 = vlaneseq
    %v217 = vshrl.u32 %v216, 7
    %v218 = vsub.s32 3, %v217
    %v219 = vrot.slane %v70, %v218
    %v220 = vlaneseq
    %v221 = vshrl.u32 %v220, 7
    %v222 = vsub.s32 5, %v221
    %v223 = vrot.slane %v70, %v222
    %v224 = vlaneseq
    %v225 = vshrl.u32 %v224, 7
    %v226 = vsub.s32 7, %v225
    %v227 = vrot.slane %v70, %v226
    %v232 = vlaneseq
    %v233 = vshrl.u32 %v232, 7
    %v234 = vsub.s32 1, %v233
    %v235 = vrot.slane %v215, %v234
    %v236 = vlaneseq
    %v237 = vshrl.u32 %v236, 7
    %v238 = vsub.s32 1, %v237
    %v239 = vrot.slane %v219, %v238
    %v240 = vlaneseq
    %v241 = vshrl.u32 %v240, 7
    %v242 = vsub.s32 1, %v241
    %v243 = vrot.slane %v223, %v242
    %v244 = vlaneseq
    %v245 = vshrl.u32 %v244, 7
    %v246 = vsub.s32 1, %v245
    %v247 = vrot.slane %v227, %v246
    %v248 = vmul.f32 %v182, %v235
    %v249 = vmul.f32 %v182, %v239
    %v250 = vmul.f32 %v182, %v243
    %v251 = vmul.f32 %v182, %v247
    %v252 = vmul.f32 %v186, %v235
    %v253 = vmul.f32 %v186, %v239
    %v254 = vmul.f32 %v186, %v243
    %v255 = vmul.f32 %v186, %v247
    %v256 = vmul.f32 %v190, %v235
    %v257 = vmul.f32 %v190, %v239
    %v258 = vmul.f32 %v190, %v243
    %v259 = vmul.f32 %v190, %v247
    %v260 = vmul.f32 %v194, %v235
    %v261 = vmul.f32 %v194, %v239
    %v262 = vmul.f32 %v194, %v243
    %v263 = vmul.f32 %v194, %v247
    %v264 = vmul.f32 %v198, %v235
    %v265 = vmul.f32 %v198, %v239
    %v266 = vmul.f32 %v198, %v243
    %v267 = vmul.f32 %v198, %v247
    %v268 = vmul.f32 %v202, %v235
    %v269 = vmul.f32 %v202, %v239
    %v270 = vmul.f32 %v202, %v243
    %v271 = vmul.f32 %v202, %v247
    %v272 = vmul.f32 %v206, %v235
    %v273 = vmul.f32 %v206, %v239
    %v274 = vmul.f32 %v206, %v243
    %v275 = vmul.f32 %v206, %v247
    %v276 = vmul.f32 %v210, %v235
    %v277 = vmul.f32 %v210, %v239
    %v278 = vmul.f32 %v210, %v243
    %v279 = vmul.f32 %v210, %v247
    %v280 = vadd.f32 %v148, %v248
    %v281 = vadd.f32 %v149, %v249
    %v282 = vadd.f32 %v150, %v250
    %v283 = vadd.f32 %v151, %v251
    %v284 = vadd.f32 %v152, %v252
    %v285 = vadd.f32 %v153, %v253
    %v286 = vadd.f32 %v154, %v254
    %v287 = vadd.f32 %v155, %v255
    %v288 = vadd.f32 %v156, %v256
    %v289 = vadd.f32 %v157, %v257
    %v290 = vadd.f32 %v158, %v258
    %v291 = vadd.f32 %v159, %v259
    %v292 = vadd.f32 %v160, %v260
    %v293 = vadd.f32 %v161, %v261
    %v294 = vadd.f32 %v162, %v262
    %v295 = vadd.f32 %v163, %v263
    %v296 = vadd.f32 %v164, %v264
    %v297 = vadd.f32 %v165, %v265
    %v298 = vadd.f32 %v166, %v266
    %v299 = vadd.f32 %v167, %v267
    %v300 = vadd.f32 %v168, %v268
    %v301 = vadd.f32 %v169, %v269
    %v302 = vadd.f32 %v170, %v270
    %v303 = vadd.f32 %v171, %v271
    %v304 = vadd.f32 %v172, %v272
    %v305 = vadd.f32 %v173, %v273
    %v306 = vadd.f32 %v174, %v274
    %v307 = vadd.f32 %v175, %v275
    %v308 = vadd.f32 %v176, %v276
    %v309 = vadd.f32 %v177, %v277
    %v310 = vadd.f32 %v178, %v278
    %v311 = vadd.f32 %v179, %v279
    %v312 = vld [vmem:[%s2] sm:$0xf]
    %v314 = vlaneseq
    %v315 = vshrl.u32 %v314, 7
    %v316 = vsub.s32 0, %v315
    %v317 = vrot.slane %v312, %v316
    %v318 = vlaneseq
    %v319 = vshrl.u32 %v318, 7
    %v320 = vsub.s32 1, %v319
    %v321 = vrot.slane %v312, %v320
    %v322 = vlaneseq
    %v323 = vshrl.u32 %v322, 7
    %v324 = vsub.s32 2, %v323
    %v325 = vrot.slane %v312, %v324
    %v326 = vlaneseq
    %v327 = vshrl.u32 %v326, 7
    %v328 = vsub.s32 3, %v327
    %v329 = vrot.slane %v312, %v328
    %v334 = vadd.f32 %v280, %v317
    %v335 = vadd.f32 %v281, %v321
    %v336 = vadd.f32 %v282, %v325
    %v337 = vadd.f32 %v283, %v329
    %v338 = vadd.f32 %v284, %v317
    %v339 = vadd.f32 %v285, %v321
    %v340 = vadd.f32 %v286, %v325
    %v341 = vadd.f32 %v287, %v329
    %v342 = vadd.f32 %v288, %v317
    %v343 = vadd.f32 %v289, %v321
    %v344 = vadd.f32 %v290, %v325
    %v345 = vadd.f32 %v291, %v329
    %v346 = vadd.f32 %v292, %v317
    %v347 = vadd.f32 %v293, %v321
    %v348 = vadd.f32 %v294, %v325
    %v349 = vadd.f32 %v295, %v329
    %v350 = vadd.f32 %v296, %v317
    %v351 = vadd.f32 %v297, %v321
    %v352 = vadd.f32 %v298, %v325
    %v353 = vadd.f32 %v299, %v329
    %v354 = vadd.f32 %v300, %v317
    %v355 = vadd.f32 %v301, %v321
    %v356 = vadd.f32 %v302, %v325
    %v357 = vadd.f32 %v303, %v329
    %v358 = vadd.f32 %v304, %v317
    %v359 = vadd.f32 %v305, %v321
    %v360 = vadd.f32 %v306, %v325
    %v361 = vadd.f32 %v307, %v329
    %v362 = vadd.f32 %v308, %v317
    %v363 = vadd.f32 %v309, %v321
    %v364 = vadd.f32 %v310, %v325
    %v365 = vadd.f32 %v311, %v329
    %v366 = vmax.f32 %v334, 0.0
    %v367 = vmax.f32 %v335, 0.0
    %v368 = vmax.f32 %v336, 0.0
    %v369 = vmax.f32 %v337, 0.0
    %v370 = vmax.f32 %v338, 0.0
    %v371 = vmax.f32 %v339, 0.0
    %v372 = vmax.f32 %v340, 0.0
    %v373 = vmax.f32 %v341, 0.0
    %v374 = vmax.f32 %v342, 0.0
    %v375 = vmax.f32 %v343, 0.0
    %v376 = vmax.f32 %v344, 0.0
    %v377 = vmax.f32 %v345, 0.0
    %v378 = vmax.f32 %v346, 0.0
    %v379 = vmax.f32 %v347, 0.0
    %v380 = vmax.f32 %v348, 0.0
    %v381 = vmax.f32 %v349, 0.0
    %v382 = vmax.f32 %v350, 0.0
    %v383 = vmax.f32 %v351, 0.0
    %v384 = vmax.f32 %v352, 0.0
    %v385 = vmax.f32 %v353, 0.0
    %v386 = vmax.f32 %v354, 0.0
    %v387 = vmax.f32 %v355, 0.0
    %v388 = vmax.f32 %v356, 0.0
    %v389 = vmax.f32 %v357, 0.0
    %v390 = vmax.f32 %v358, 0.0
    %v391 = vmax.f32 %v359, 0.0
    %v392 = vmax.f32 %v360, 0.0
    %v393 = vmax.f32 %v361, 0.0
    %v394 = vmax.f32 %v362, 0.0
    %v395 = vmax.f32 %v363, 0.0
    %v396 = vmax.f32 %v364, 0.0
    %v397 = vmax.f32 %v365, 0.0
    %v398 = vld [vmem:[#allocation3] sm:$0xff]
    %v399 = vld [vmem:[#allocation3 + $0x8] sm:$0xff]
    %v400 = vld [vmem:[#allocation3 + $0x10] sm:$0xff]
    %v401 = vld [vmem:[#allocation3 + $0x18] sm:$0xff]
    %v402 = vld [vmem:[#allocation3 + $0x20] sm:$0xff]
    %v403 = vld [vmem:[#allocation3 + $0x28] sm:$0xff]
    %v404 = vld [vmem:[#allocation3 + $0x30] sm:$0xff]
    %v405 = vld [vmem:[#allocation3 + $0x38] sm:$0xff]
    %v406 = vld [vmem:[#allocation3 + $0x40] sm:$0xff]
    %v407 = vld [vmem:[#allocation3 + $0x48] sm:$0xff]
    %v408 = vld [vmem:[#allocation3 + $0x50] sm:$0xff]
    %v409 = vld [vmem:[#allocation3 + $0x58] sm:$0xff]
    %v410 = vld [vmem:[#allocation3 + $0x60] sm:$0xff]
    %v411 = vld [vmem:[#allocation3 + $0x68] sm:$0xff]
    %v412 = vld [vmem:[#allocation3 + $0x70] sm:$0xff]
    %v413 = vld [vmem:[#allocation3 + $0x78] sm:$0xff]
    %v414 = vld [vmem:[#allocation3 + $0x80] sm:$0xff]
    %v415 = vld [vmem:[#allocation3 + $0x88] sm:$0xff]
    %v416 = vld [vmem:[#allocation3 + $0x90] sm:$0xff]
    %v417 = vld [vmem:[#allocation3 + $0x98] sm:$0xff]
    %v418 = vld [vmem:[#allocation3 + $0xa0] sm:$0xff]
    %v419 = vld [vmem:[#allocation3 + $0xa8] sm:$0xff]
    %v420 = vld [vmem:[#allocation3 + $0xb0] sm:$0xff]
    %v421 = vld [vmem:[#allocation3 + $0xb8] sm:$0xff]
    %v422 = vld [vmem:[#allocation3 + $0xc0] sm:$0xff]
    %v423 = vld [vmem:[#allocation3 + $0xc8] sm:$0xff]
    %v424 = vld [vmem:[#allocation3 + $0xd0] sm:$0xff]
    %v425 = vld [vmem:[#allocation3 + $0xd8] sm:$0xff]
    %v426 = vld [vmem:[#allocation3 + $0xe0] sm:$0xff]
    %v427 = vld [vmem:[#allocation3 + $0xe8] sm:$0xff]
    %v428 = vld [vmem:[#allocation3 + $0xf0] sm:$0xff]
    %v429 = vld [vmem:[#allocation3 + $0xf8] sm:$0xff]
    %v430 = vld [vmem:[#allocation3 + $0x100] sm:$0xff]
    %v431 = vld [vmem:[#allocation3 + $0x108] sm:$0xff]
    %v432 = vld [vmem:[#allocation3 + $0x110] sm:$0xff]
    %v433 = vld [vmem:[#allocation3 + $0x118] sm:$0xff]
    %v434 = vld [vmem:[#allocation3 + $0x120] sm:$0xff]
    %v435 = vld [vmem:[#allocation3 + $0x128] sm:$0xff]
    %v436 = vld [vmem:[#allocation3 + $0x130] sm:$0xff]
    %v437 = vld [vmem:[#allocation3 + $0x138] sm:$0xff]
    %v438 = vld [vmem:[#allocation3 + $0x140] sm:$0xff]
    %v439 = vld [vmem:[#allocation3 + $0x148] sm:$0xff]
    %v440 = vld [vmem:[#allocation3 + $0x150] sm:$0xff]
    %v441 = vld [vmem:[#allocation3 + $0x158] sm:$0xff]
    %v442 = vld [vmem:[#allocation3 + $0x160] sm:$0xff]
    %v443 = vld [vmem:[#allocation3 + $0x168] sm:$0xff]
    %v444 = vld [vmem:[#allocation3 + $0x170] sm:$0xff]
    %v445 = vld [vmem:[#allocation3 + $0x178] sm:$0xff]
    %v446 = vld [vmem:[#allocation3 + $0x180] sm:$0xff]
    %v447 = vld [vmem:[#allocation3 + $0x188] sm:$0xff]
    %v448 = vld [vmem:[#allocation3 + $0x190] sm:$0xff]
    %v449 = vld [vmem:[#allocation3 + $0x198] sm:$0xff]
    %v450 = vld [vmem:[#allocation3 + $0x1a0] sm:$0xff]
    %v451 = vld [vmem:[#allocation3 + $0x1a8] sm:$0xff]
    %v452 = vld [vmem:[#allocation3 + $0x1b0] sm:$0xff]
    %v453 = vld [vmem:[#allocation3 + $0x1b8] sm:$0xff]
    %v454 = vld [vmem:[#allocation3 + $0x1c0] sm:$0xff]
    %v455 = vld [vmem:[#allocation3 + $0x1c8] sm:$0xff]
    %v456 = vld [vmem:[#allocation3 + $0x1d0] sm:$0xff]
    %v457 = vld [vmem:[#allocation3 + $0x1d8] sm:$0xff]
    %v458 = vld [vmem:[#allocation3 + $0x1e0] sm:$0xff]
    %v459 = vld [vmem:[#allocation3 + $0x1e8] sm:$0xff]
    %v460 = vld [vmem:[#allocation3 + $0x1f0] sm:$0xff]
    %v461 = vld [vmem:[#allocation3 + $0x1f8] sm:$0xff]
    %v462 = vld [vmem:[#allocation3 + $0x200] sm:$0xff]
    %v463 = vld [vmem:[#allocation3 + $0x208] sm:$0xff]
    %v464 = vld [vmem:[#allocation3 + $0x210] sm:$0xff]
    %v465 = vld [vmem:[#allocation3 + $0x218] sm:$0xff]
    %v466 = vld [vmem:[#allocation3 + $0x220] sm:$0xff]
    %v467 = vld [vmem:[#allocation3 + $0x228] sm:$0xff]
    %v468 = vld [vmem:[#allocation3 + $0x230] sm:$0xff]
    %v469 = vld [vmem:[#allocation3 + $0x238] sm:$0xff]
    %v470 = vld [vmem:[#allocation3 + $0x240] sm:$0xff]
    %v471 = vld [vmem:[#allocation3 + $0x248] sm:$0xff]
    %v472 = vld [vmem:[#allocation3 + $0x250] sm:$0xff]
    %v473 = vld [vmem:[#allocation3 + $0x258] sm:$0xff]
    %v474 = vld [vmem:[#allocation3 + $0x260] sm:$0xff]
    %v475 = vld [vmem:[#allocation3 + $0x268] sm:$0xff]
    %v476 = vld [vmem:[#allocation3 + $0x270] sm:$0xff]
    %v477 = vld [vmem:[#allocation3 + $0x278] sm:$0xff]
    %v478 = vld [vmem:[#allocation3 + $0x280] sm:$0xff]
    %v479 = vld [vmem:[#allocation3 + $0x288] sm:$0xff]
    %v480 = vld [vmem:[#allocation3 + $0x290] sm:$0xff]
    %v481 = vld [vmem:[#allocation3 + $0x298] sm:$0xff]
    %v482 = vld [vmem:[#allocation3 + $0x2a0] sm:$0xff]
    %v483 = vld [vmem:[#allocation3 + $0x2a8] sm:$0xff]
    %v484 = vld [vmem:[#allocation3 + $0x2b0] sm:$0xff]
    %v485 = vld [vmem:[#allocation3 + $0x2b8] sm:$0xff]
    %v486 = vld [vmem:[#allocation3 + $0x2c0] sm:$0xff]
    %v487 = vld [vmem:[#allocation3 + $0x2c8] sm:$0xff]
    %v488 = vld [vmem:[#allocation3 + $0x2d0] sm:$0xff]
    %v489 = vld [vmem:[#allocation3 + $0x2d8] sm:$0xff]
    %v490 = vld [vmem:[#allocation3 + $0x2e0] sm:$0xff]
    %v491 = vld [vmem:[#allocation3 + $0x2e8] sm:$0xff]
    %v492 = vld [vmem:[#allocation3 + $0x2f0] sm:$0xff]
    %v493 = vld [vmem:[#allocation3 + $0x2f8] sm:$0xff]
    %v494 = vld [vmem:[#allocation3 + $0x300] sm:$0xff]
    %v495 = vld [vmem:[#allocation3 + $0x308] sm:$0xff]
    %v496 = vld [vmem:[#allocation3 + $0x310] sm:$0xff]
    %v497 = vld [vmem:[#allocation3 + $0x318] sm:$0xff]
    %v498 = vld [vmem:[#allocation3 + $0x320] sm:$0xff]
    %v499 = vld [vmem:[#allocation3 + $0x328] sm:$0xff]
    %v500 = vld [vmem:[#allocation3 + $0x330] sm:$0xff]
    %v501 = vld [vmem:[#allocation3 + $0x338] sm:$0xff]
    %v502 = vld [vmem:[#allocation3 + $0x340] sm:$0xff]
    %v503 = vld [vmem:[#allocation3 + $0x348] sm:$0xff]
    %v504 = vld [vmem:[#allocation3 + $0x350] sm:$0xff]
    %v505 = vld [vmem:[#allocation3 + $0x358] sm:$0xff]
    %v506 = vld [vmem:[#allocation3 + $0x360] sm:$0xff]
    %v507 = vld [vmem:[#allocation3 + $0x368] sm:$0xff]
    %v508 = vld [vmem:[#allocation3 + $0x370] sm:$0xff]
    %v509 = vld [vmem:[#allocation3 + $0x378] sm:$0xff]
    %v510 = vld [vmem:[#allocation3 + $0x380] sm:$0xff]
    %v511 = vld [vmem:[#allocation3 + $0x388] sm:$0xff]
    %v512 = vld [vmem:[#allocation3 + $0x390] sm:$0xff]
    %v513 = vld [vmem:[#allocation3 + $0x398] sm:$0xff]
    %v514 = vld [vmem:[#allocation3 + $0x3a0] sm:$0xff]
    %v515 = vld [vmem:[#allocation3 + $0x3a8] sm:$0xff]
    %v516 = vld [vmem:[#allocation3 + $0x3b0] sm:$0xff]
    %v517 = vld [vmem:[#allocation3 + $0x3b8] sm:$0xff]
    %v518 = vld [vmem:[#allocation3 + $0x3c0] sm:$0xff]
    %v519 = vld [vmem:[#allocation3 + $0x3c8] sm:$0xff]
    %v520 = vld [vmem:[#allocation3 + $0x3d0] sm:$0xff]
    %v521 = vld [vmem:[#allocation3 + $0x3d8] sm:$0xff]
    %v522 = vld [vmem:[#allocation3 + $0x3e0] sm:$0xff]
    %v523 = vld [vmem:[#allocation3 + $0x3e8] sm:$0xff]
    %v524 = vld [vmem:[#allocation3 + $0x3f0] sm:$0xff]
    %v525 = vld [vmem:[#allocation3 + $0x3f8] sm:$0xff]
    %v526 = vld [vmem:[#allocation3 + $0x400] sm:$0xff]
    %v527 = vld [vmem:[#allocation3 + $0x408] sm:$0xff]
    %v528 = vld [vmem:[#allocation3 + $0x410] sm:$0xff]
    %v529 = vld [vmem:[#allocation3 + $0x418] sm:$0xff]
    %v530 = vld [vmem:[#allocation3 + $0x420] sm:$0xff]
    %v531 = vld [vmem:[#allocation3 + $0x428] sm:$0xff]
    %v532 = vld [vmem:[#allocation3 + $0x430] sm:$0xff]
    %v533 = vld [vmem:[#allocation3 + $0x438] sm:$0xff]
    %v534 = vld [vmem:[#allocation3 + $0x440] sm:$0xff]
    %v535 = vld [vmem:[#allocation3 + $0x448] sm:$0xff]
    %v536 = vld [vmem:[#allocation3 + $0x450] sm:$0xff]
    %v537 = vld [vmem:[#allocation3 + $0x458] sm:$0xff]
    %v538 = vld [vmem:[#allocation3 + $0x460] sm:$0xff]
    %v539 = vld [vmem:[#allocation3 + $0x468] sm:$0xff]
    %v540 = vld [vmem:[#allocation3 + $0x470] sm:$0xff]
    %v541 = vld [vmem:[#allocation3 + $0x478] sm:$0xff]
    %v542 = vld [vmem:[#allocation3 + $0x480] sm:$0xff]
    %v543 = vld [vmem:[#allocation3 + $0x488] sm:$0xff]
    %v544 = vld [vmem:[#allocation3 + $0x490] sm:$0xff]
    %v545 = vld [vmem:[#allocation3 + $0x498] sm:$0xff]
    %v546 = vld [vmem:[#allocation3 + $0x4a0] sm:$0xff]
    %v547 = vld [vmem:[#allocation3 + $0x4a8] sm:$0xff]
    %v548 = vld [vmem:[#allocation3 + $0x4b0] sm:$0xff]
    %v549 = vld [vmem:[#allocation3 + $0x4b8] sm:$0xff]
    %v550 = vld [vmem:[#allocation3 + $0x4c0] sm:$0xff]
    %v551 = vld [vmem:[#allocation3 + $0x4c8] sm:$0xff]
    %v552 = vld [vmem:[#allocation3 + $0x4d0] sm:$0xff]
    %v553 = vld [vmem:[#allocation3 + $0x4d8] sm:$0xff]
    %v554 = vld [vmem:[#allocation3 + $0x4e0] sm:$0xff]
    %v555 = vld [vmem:[#allocation3 + $0x4e8] sm:$0xff]
    %v556 = vld [vmem:[#allocation3 + $0x4f0] sm:$0xff]
    %v557 = vld [vmem:[#allocation3 + $0x4f8] sm:$0xff]
    %v558 = vld [vmem:[#allocation3 + $0x500] sm:$0xff]
    %v559 = vld [vmem:[#allocation3 + $0x508] sm:$0xff]
    %v560 = vld [vmem:[#allocation3 + $0x510] sm:$0xff]
    %v561 = vld [vmem:[#allocation3 + $0x518] sm:$0xff]
    %v562 = vld [vmem:[#allocation3 + $0x520] sm:$0xff]
    %v563 = vld [vmem:[#allocation3 + $0x528] sm:$0xff]
    %v564 = vld [vmem:[#allocation3 + $0x530] sm:$0xff]
    %v565 = vld [vmem:[#allocation3 + $0x538] sm:$0xff]
    %v566 = vld [vmem:[#allocation3 + $0x540] sm:$0xff]
    %v567 = vld [vmem:[#allocation3 + $0x548] sm:$0xff]
    %v568 = vld [vmem:[#allocation3 + $0x550] sm:$0xff]
    %v569 = vld [vmem:[#allocation3 + $0x558] sm:$0xff]
    %v570 = vld [vmem:[#allocation3 + $0x560] sm:$0xff]
    %v571 = vld [vmem:[#allocation3 + $0x568] sm:$0xff]
    %v572 = vld [vmem:[#allocation3 + $0x570] sm:$0xff]
    %v573 = vld [vmem:[#allocation3 + $0x578] sm:$0xff]
    %v574 = vld [vmem:[#allocation3 + $0x580] sm:$0xff]
    %v575 = vld [vmem:[#allocation3 + $0x588] sm:$0xff]
    %v576 = vld [vmem:[#allocation3 + $0x590] sm:$0xff]
    %v577 = vld [vmem:[#allocation3 + $0x598] sm:$0xff]
    %v578 = vld [vmem:[#allocation3 + $0x5a0] sm:$0xff]
    %v579 = vld [vmem:[#allocation3 + $0x5a8] sm:$0xff]
    %v580 = vld [vmem:[#allocation3 + $0x5b0] sm:$0xff]
    %v581 = vld [vmem:[#allocation3 + $0x5b8] sm:$0xff]
    %v582 = vld [vmem:[#allocation3 + $0x5c0] sm:$0xff]
    %v583 = vld [vmem:[#allocation3 + $0x5c8] sm:$0xff]
    %v584 = vld [vmem:[#allocation3 + $0x5d0] sm:$0xff]
    %v585 = vld [vmem:[#allocation3 + $0x5d8] sm:$0xff]
    %v586 = vld [vmem:[#allocation3 + $0x5e0] sm:$0xff]
    %v587 = vld [vmem:[#allocation3 + $0x5e8] sm:$0xff]
    %v588 = vld [vmem:[#allocation3 + $0x5f0] sm:$0xff]
    %v589 = vld [vmem:[#allocation3 + $0x5f8] sm:$0xff]
    %v590 = vld [vmem:[#allocation3 + $0x600] sm:$0xff]
    %v591 = vld [vmem:[#allocation3 + $0x608] sm:$0xff]
    %v592 = vld [vmem:[#allocation3 + $0x610] sm:$0xff]
    %v593 = vld [vmem:[#allocation3 + $0x618] sm:$0xff]
    %v594 = vld [vmem:[#allocation3 + $0x620] sm:$0xff]
    %v595 = vld [vmem:[#allocation3 + $0x628] sm:$0xff]
    %v596 = vld [vmem:[#allocation3 + $0x630] sm:$0xff]
    %v597 = vld [vmem:[#allocation3 + $0x638] sm:$0xff]
    %v598 = vld [vmem:[%s4] sm:$0xf]
    %v600 = vlaneseq
    %v601 = vshrl.u32 %v600, 7
    %v602 = vsub.s32 0, %v601
    %v603 = vrot.slane %v598, %v602
    %v604 = vlaneseq
    %v605 = vshrl.u32 %v604, 7
    %v606 = vsub.s32 1, %v605
    %v607 = vrot.slane %v598, %v606
    %v608 = vlaneseq
    %v609 = vshrl.u32 %v608, 7
    %v610 = vsub.s32 2, %v609
    %v611 = vrot.slane %v598, %v610
    %v612 = vlaneseq
    %v613 = vshrl.u32 %v612, 7
    %v614 = vsub.s32 3, %v613
    %v615 = vrot.slane %v598, %v614
    %vm620 = vcmask 130048
    %v622 = vsel %vm620, %v369, 0
    %v625 = vsel %vm620, %v373, 0
    %v628 = vsel %vm620, %v377, 0
    %v631 = vsel %vm620, %v381, 0
    %v634 = vsel %vm620, %v385, 0
    %v637 = vsel %vm620, %v389, 0
    %v640 = vsel %vm620, %v393, 0
    %v643 = vsel %vm620, %v397, 0
    %645 = vmatprep.subr.mxu0 %v459
    %646 = vmatpush1.msra.mxu0 %v458
    %647 = vmatprep.subr.mxu0 %v455
    %648 = vmatpush1.msra.mxu0 %v454
    %649 = vmatprep.subr.mxu0 %v451
    %650 = vmatpush1.msra.mxu0 %v450
    %651 = vmatprep.subr.mxu0 %v447
    %652 = vmatpush1.msra.mxu0 %v446
    %653 = vmatprep.subr.mxu0 %v443
    %654 = vmatpush1.msra.mxu0 %v442
    %655 = vmatprep.subr.mxu0 %v439
    %656 = vmatpush1.msra.mxu0 %v438
    %657 = vmatprep.subr.mxu0 %v435
    %658 = vmatpush1.msra.mxu0 %v434
    %659 = vmatprep.subr.mxu0 %v431
    %660 = vmatpush1.msra.mxu0 %v430
    %661 = vmatprep.subr.mxu0 %v427
    %662 = vmatpush1.msra.mxu0 %v426
    %663 = vmatprep.subr.mxu0 %v423
    %664 = vmatpush1.msra.mxu0 %v422
    %665 = vmatprep.subr.mxu0 %v419
    %666 = vmatpush1.msra.mxu0 %v418
    %667 = vmatprep.subr.mxu0 %v415
    %668 = vmatpush1.msra.mxu0 %v414
    %669 = vmatprep.subr.mxu0 %v411
    %670 = vmatpush1.msra.mxu0 %v410
    %671 = vmatprep.subr.mxu0 %v407
    %672 = vmatpush1.msra.mxu0 %v406
    %673 = vmatprep.subr.mxu0 %v403
    %674 = vmatpush1.msra.mxu0 %v402
    %675 = vmatprep.subr.mxu0 %v399
    %676 = vmatpush1.msra.mxu0 %v398
    %677 = vmatprep.subr.mxu0 %v523
    %678 = vmatpush2.msra.mxu0 %v522
    %679 = vmatprep.subr.mxu0 %v519
    %680 = vmatpush2.msra.mxu0 %v518
    %681 = vmatprep.subr.mxu0 %v515
    %682 = vmatpush2.msra.mxu0 %v514
    %683 = vmatprep.subr.mxu0 %v511
    %684 = vmatpush2.msra.mxu0 %v510
    %685 = vmatprep.subr.mxu0 %v507
    %686 = vmatpush2.msra.mxu0 %v506
    %687 = vmatprep.subr.mxu0 %v503
    %688 = vmatpush2.msra.mxu0 %v502
    %689 = vmatprep.subr.mxu0 %v499
    %690 = vmatpush2.msra.mxu0 %v498
    %691 = vmatprep.subr.mxu0 %v495
    %692 = vmatpush2.msra.mxu0 %v494
    %693 = vmatprep.subr.mxu0 %v491
    %694 = vmatpush2.msra.mxu0 %v490
    %695 = vmatprep.subr.mxu0 %v487
    %696 = vmatpush2.msra.mxu0 %v486
    %697 = vmatprep.subr.mxu0 %v483
    %698 = vmatpush2.msra.mxu0 %v482
    %699 = vmatprep.subr.mxu0 %v479
    %700 = vmatpush2.msra.mxu0 %v478
    %701 = vmatprep.subr.mxu0 %v475
    %702 = vmatpush2.msra.mxu0 %v474
    %703 = vmatprep.subr.mxu0 %v471
    %704 = vmatpush2.msra.mxu0 %v470
    %705 = vmatprep.subr.mxu0 %v467
    %706 = vmatpush2.msra.mxu0 %v466
    %707 = vmatprep.subr.mxu0 %v463
    %708 = vmatpush2.msra.mxu0 %v462
    %709 = vmatprep.mubr.f32.mxu0 %v367
    %710 = vmatmul.mubr.f32.gmra.mxu0 %v366
    %v711 = vpop.f32.mrf.mxu0
    %v712 = vadd.f32 %v603, %v711
    %v713 = vpop.f32.mrf.mxu0
    %v714 = vadd.f32 %v607, %v713
    %715 = vmatprep.mubr.f32.mxu0 %v371
    %716 = vmatmul.mubr.f32.gmra.mxu0 %v370
    %v717 = vpop.f32.mrf.mxu0
    %v718 = vadd.f32 %v603, %v717
    %v719 = vpop.f32.mrf.mxu0
    %v720 = vadd.f32 %v607, %v719
    %721 = vmatprep.mubr.f32.mxu0 %v375
    %722 = vmatmul.mubr.f32.gmra.mxu0 %v374
    %v723 = vpop.f32.mrf.mxu0
    %v724 = vadd.f32 %v603, %v723
    %v725 = vpop.f32.mrf.mxu0
    %v726 = vadd.f32 %v607, %v725
    %727 = vmatprep.mubr.f32.mxu0 %v379
    %728 = vmatmul.mubr.f32.gmra.mxu0 %v378
    %v729 = vpop.f32.mrf.mxu0
    %v730 = vadd.f32 %v603, %v729
    %v731 = vpop.f32.mrf.mxu0
    %v732 = vadd.f32 %v607, %v731
    %733 = vmatprep.mubr.f32.mxu0 %v383
    %734 = vmatmul.mubr.f32.gmra.mxu0 %v382
    %v735 = vpop.f32.mrf.mxu0
    %v736 = vadd.f32 %v603, %v735
    %v737 = vpop.f32.mrf.mxu0
    %v738 = vadd.f32 %v607, %v737
    %739 = vmatprep.mubr.f32.mxu0 %v387
    %740 = vmatmul.mubr.f32.gmra.mxu0 %v386
    %v741 = vpop.f32.mrf.mxu0
    %v742 = vadd.f32 %v603, %v741
    %v743 = vpop.f32.mrf.mxu0
    %v744 = vadd.f32 %v607, %v743
    %745 = vmatprep.mubr.f32.mxu0 %v391
    %746 = vmatmul.mubr.f32.gmra.mxu0 %v390
    %v747 = vpop.f32.mrf.mxu0
    %v748 = vadd.f32 %v603, %v747
    %v749 = vpop.f32.mrf.mxu0
    %v750 = vadd.f32 %v607, %v749
    %751 = vmatprep.mubr.f32.mxu0 %v395
    %752 = vmatmul.mubr.f32.gmra.mxu0 %v394
    %v753 = vpop.f32.mrf.mxu0
    %v754 = vadd.f32 %v603, %v753
    %v755 = vpop.f32.mrf.mxu0
    %v756 = vadd.f32 %v607, %v755
    %757 = vdwg.mxu0
    %758 = vmatprep.subr.mxu0 %v587
    %759 = vmatpush1.msra.mxu0 %v586
    %760 = vmatprep.subr.mxu0 %v583
    %761 = vmatpush1.msra.mxu0 %v582
    %762 = vmatprep.subr.mxu0 %v579
    %763 = vmatpush1.msra.mxu0 %v578
    %764 = vmatprep.subr.mxu0 %v575
    %765 = vmatpush1.msra.mxu0 %v574
    %766 = vmatprep.subr.mxu0 %v571
    %767 = vmatpush1.msra.mxu0 %v570
    %768 = vmatprep.subr.mxu0 %v567
    %769 = vmatpush1.msra.mxu0 %v566
    %770 = vmatprep.subr.mxu0 %v563
    %771 = vmatpush1.msra.mxu0 %v562
    %772 = vmatprep.subr.mxu0 %v559
    %773 = vmatpush1.msra.mxu0 %v558
    %774 = vmatprep.subr.mxu0 %v555
    %775 = vmatpush1.msra.mxu0 %v554
    %776 = vmatprep.subr.mxu0 %v551
    %777 = vmatpush1.msra.mxu0 %v550
    %778 = vmatprep.subr.mxu0 %v547
    %779 = vmatpush1.msra.mxu0 %v546
    %780 = vmatprep.subr.mxu0 %v543
    %781 = vmatpush1.msra.mxu0 %v542
    %782 = vmatprep.subr.mxu0 %v539
    %783 = vmatpush1.msra.mxu0 %v538
    %784 = vmatprep.subr.mxu0 %v535
    %785 = vmatpush1.msra.mxu0 %v534
    %786 = vmatprep.subr.mxu0 %v531
    %787 = vmatpush1.msra.mxu0 %v530
    %788 = vmatprep.subr.mxu0 %v527
    %789 = vmatpush1.msra.mxu0 %v526
    %790 = vmatprep.subr.mxu0 0.0
    %791 = vmatpush2.msra.mxu0 0.0
    %792 = vmatprep.subr.mxu0 0.0
    %793 = vmatpush2.msra.mxu0 0.0
    %794 = vmatprep.subr.mxu0 0.0
    %795 = vmatpush2.msra.mxu0 0.0
    %796 = vmatprep.subr.mxu0 0.0
    %797 = vmatpush2.msra.mxu0 0.0
    %798 = vmatprep.subr.mxu0 0.0
    %799 = vmatpush2.msra.mxu0 0.0
    %800 = vmatprep.subr.mxu0 0.0
    %801 = vmatpush2.msra.mxu0 0.0
    %802 = vmatprep.subr.mxu0 0.0
    %803 = vmatpush2.msra.mxu0 0.0
    %804 = vmatprep.subr.mxu0 0.0
    %805 = vmatpush2.msra.mxu0 0.0
    %806 = vmatprep.subr.mxu0 0.0
    %807 = vmatpush2.msra.mxu0 0.0
    %808 = vmatprep.subr.mxu0 0.0
    %809 = vmatpush2.msra.mxu0 0.0
    %810 = vmatprep.subr.mxu0 0.0
    %811 = vmatpush2.msra.mxu0 0.0
    %812 = vmatprep.subr.mxu0 0.0
    %813 = vmatpush2.msra.mxu0 0.0
    %814 = vmatprep.subr.mxu0 0.0
    %815 = vmatpush2.msra.mxu0 0.0
    %816 = vmatprep.subr.mxu0 0.0
    %817 = vmatpush2.msra.mxu0 0.0
    %818 = vmatprep.subr.mxu0 %v595
    %819 = vmatpush2.msra.mxu0 %v594
    %820 = vmatprep.subr.mxu0 %v591
    %821 = vmatpush2.msra.mxu0 %v590
    %822 = vmatprep.mubr.f32.mxu0 %v622
    %823 = vmatmul.mubr.f32.gmra.mxu0 %v368
    %v824 = vpop.f32.mrf.mxu0
    %v825 = vadd.f32 %v712, %v824
    %v826 = vpop.f32.mrf.mxu0
    %v827 = vadd.f32 %v714, %v826
    %828 = vmatprep.mubr.f32.mxu0 %v625
    %829 = vmatmul.mubr.f32.gmra.mxu0 %v372
    %v830 = vpop.f32.mrf.mxu0
    %v831 = vadd.f32 %v718, %v830
    %v832 = vpop.f32.mrf.mxu0
    %v833 = vadd.f32 %v720, %v832
    %834 = vmatprep.mubr.f32.mxu0 %v628
    %835 = vmatmul.mubr.f32.gmra.mxu0 %v376
    %v836 = vpop.f32.mrf.mxu0
    %v837 = vadd.f32 %v724, %v836
    %v838 = vpop.f32.mrf.mxu0
    %v839 = vadd.f32 %v726, %v838
    %840 = vmatprep.mubr.f32.mxu0 %v631
    %841 = vmatmul.mubr.f32.gmra.mxu0 %v380
    %v842 = vpop.f32.mrf.mxu0
    %v843 = vadd.f32 %v730, %v842
    %v844 = vpop.f32.mrf.mxu0
    %v845 = vadd.f32 %v732, %v844
    %846 = vmatprep.mubr.f32.mxu0 %v634
    %847 = vmatmul.mubr.f32.gmra.mxu0 %v384
    %v848 = vpop.f32.mrf.mxu0
    %v849 = vadd.f32 %v736, %v848
    %v850 = vpop.f32.mrf.mxu0
    %v851 = vadd.f32 %v738, %v850
    %852 = vmatprep.mubr.f32.mxu0 %v637
    %853 = vmatmul.mubr.f32.gmra.mxu0 %v388
    %v854 = vpop.f32.mrf.mxu0
    %v855 = vadd.f32 %v742, %v854
    %v856 = vpop.f32.mrf.mxu0
    %v857 = vadd.f32 %v744, %v856
    %858 = vmatprep.mubr.f32.mxu0 %v640
    %859 = vmatmul.mubr.f32.gmra.mxu0 %v392
    %v860 = vpop.f32.mrf.mxu0
    %v861 = vadd.f32 %v748, %v860
    %v862 = vpop.f32.mrf.mxu0
    %v863 = vadd.f32 %v750, %v862
    %864 = vmatprep.mubr.f32.mxu0 %v643
    %865 = vmatmul.mubr.f32.gmra.mxu0 %v396
    %v866 = vpop.f32.mrf.mxu0
    %v867 = vadd.f32 %v754, %v866
    %v868 = vpop.f32.mrf.mxu0
    %v869 = vadd.f32 %v756, %v868
    %870 = vdwg.mxu0
    %871 = vmatprep.subr.mxu0 %v461
    %872 = vmatpush1.msra.mxu0 %v460
    %873 = vmatprep.subr.mxu0 %v457
    %874 = vmatpush1.msra.mxu0 %v456
    %875 = vmatprep.subr.mxu0 %v453
    %876 = vmatpush1.msra.mxu0 %v452
    %877 = vmatprep.subr.mxu0 %v449
    %878 = vmatpush1.msra.mxu0 %v448
    %879 = vmatprep.subr.mxu0 %v445
    %880 = vmatpush1.msra.mxu0 %v444
    %881 = vmatprep.subr.mxu0 %v441
    %882 = vmatpush1.msra.mxu0 %v440
    %883 = vmatprep.subr.mxu0 %v437
    %884 = vmatpush1.msra.mxu0 %v436
    %885 = vmatprep.subr.mxu0 %v433
    %886 = vmatpush1.msra.mxu0 %v432
    %887 = vmatprep.subr.mxu0 %v429
    %888 = vmatpush1.msra.mxu0 %v428
    %889 = vmatprep.subr.mxu0 %v425
    %890 = vmatpush1.msra.mxu0 %v424
    %891 = vmatprep.subr.mxu0 %v421
    %892 = vmatpush1.msra.mxu0 %v420
    %893 = vmatprep.subr.mxu0 %v417
    %894 = vmatpush1.msra.mxu0 %v416
    %895 = vmatprep.subr.mxu0 %v413
    %896 = vmatpush1.msra.mxu0 %v412
    %897 = vmatprep.subr.mxu0 %v409
    %898 = vmatpush1.msra.mxu0 %v408
    %899 = vmatprep.subr.mxu0 %v405
    %900 = vmatpush1.msra.mxu0 %v404
    %901 = vmatprep.subr.mxu0 %v401
    %902 = vmatpush1.msra.mxu0 %v400
    %903 = vmatprep.subr.mxu0 %v525
    %904 = vmatpush2.msra.mxu0 %v524
    %905 = vmatprep.subr.mxu0 %v521
    %906 = vmatpush2.msra.mxu0 %v520
    %907 = vmatprep.subr.mxu0 %v517
    %908 = vmatpush2.msra.mxu0 %v516
    %909 = vmatprep.subr.mxu0 %v513
    %910 = vmatpush2.msra.mxu0 %v512
    %911 = vmatprep.subr.mxu0 %v509
    %912 = vmatpush2.msra.mxu0 %v508
    %913 = vmatprep.subr.mxu0 %v505
    %914 = vmatpush2.msra.mxu0 %v504
    %915 = vmatprep.subr.mxu0 %v501
    %916 = vmatpush2.msra.mxu0 %v500
    %917 = vmatprep.subr.mxu0 %v497
    %918 = vmatpush2.msra.mxu0 %v496
    %919 = vmatprep.subr.mxu0 %v493
    %920 = vmatpush2.msra.mxu0 %v492
    %921 = vmatprep.subr.mxu0 %v489
    %922 = vmatpush2.msra.mxu0 %v488
    %923 = vmatprep.subr.mxu0 %v485
    %924 = vmatpush2.msra.mxu0 %v484
    %925 = vmatprep.subr.mxu0 %v481
    %926 = vmatpush2.msra.mxu0 %v480
    %927 = vmatprep.subr.mxu0 %v477
    %928 = vmatpush2.msra.mxu0 %v476
    %929 = vmatprep.subr.mxu0 %v473
    %930 = vmatpush2.msra.mxu0 %v472
    %931 = vmatprep.subr.mxu0 %v469
    %932 = vmatpush2.msra.mxu0 %v468
    %933 = vmatprep.subr.mxu0 %v465
    %934 = vmatpush2.msra.mxu0 %v464
    %935 = vmatprep.mubr.f32.mxu0 %v367
    %936 = vmatmul.mubr.f32.gmra.mxu0 %v366
    %v937 = vpop.f32.mrf.mxu0
    %v938 = vadd.f32 %v611, %v937
    %v939 = vpop.f32.mrf.mxu0
    %v940 = vadd.f32 %v615, %v939
    %941 = vmatprep.mubr.f32.mxu0 %v371
    %942 = vmatmul.mubr.f32.gmra.mxu0 %v370
    %v943 = vpop.f32.mrf.mxu0
    %v944 = vadd.f32 %v611, %v943
    %v945 = vpop.f32.mrf.mxu0
    %v946 = vadd.f32 %v615, %v945
    %947 = vmatprep.mubr.f32.mxu0 %v375
    %948 = vmatmul.mubr.f32.gmra.mxu0 %v374
    %v949 = vpop.f32.mrf.mxu0
    %v950 = vadd.f32 %v611, %v949
    %v951 = vpop.f32.mrf.mxu0
    %v952 = vadd.f32 %v615, %v951
    %953 = vmatprep.mubr.f32.mxu0 %v379
    %954 = vmatmul.mubr.f32.gmra.mxu0 %v378
    %v955 = vpop.f32.mrf.mxu0
    %v956 = vadd.f32 %v611, %v955
    %v957 = vpop.f32.mrf.mxu0
    %v958 = vadd.f32 %v615, %v957
    %959 = vmatprep.mubr.f32.mxu0 %v383
    %960 = vmatmul.mubr.f32.gmra.mxu0 %v382
    %v961 = vpop.f32.mrf.mxu0
    %v962 = vadd.f32 %v611, %v961
    %v963 = vpop.f32.mrf.mxu0
    %v964 = vadd.f32 %v615, %v963
    %965 = vmatprep.mubr.f32.mxu0 %v387
    %966 = vmatmul.mubr.f32.gmra.mxu0 %v386
    %v967 = vpop.f32.mrf.mxu0
    %v968 = vadd.f32 %v611, %v967
    %v969 = vpop.f32.mrf.mxu0
    %v970 = vadd.f32 %v615, %v969
    %971 = vmatprep.mubr.f32.mxu0 %v391
    %972 = vmatmul.mubr.f32.gmra.mxu0 %v390
    %v973 = vpop.f32.mrf.mxu0
    %v974 = vadd.f32 %v611, %v973
    %v975 = vpop.f32.mrf.mxu0
    %v976 = vadd.f32 %v615, %v975
    %977 = vmatprep.mubr.f32.mxu0 %v395
    %978 = vmatmul.mubr.f32.gmra.mxu0 %v394
    %v979 = vpop.f32.mrf.mxu0
    %v980 = vadd.f32 %v611, %v979
    %v981 = vpop.f32.mrf.mxu0
    %v982 = vadd.f32 %v615, %v981
    %983 = vdwg.mxu0
    %984 = vmatprep.subr.mxu0 %v589
    %985 = vmatpush1.msra.mxu0 %v588
    %986 = vmatprep.subr.mxu0 %v585
    %987 = vmatpush1.msra.mxu0 %v584
    %988 = vmatprep.subr.mxu0 %v581
    %989 = vmatpush1.msra.mxu0 %v580
    %990 = vmatprep.subr.mxu0 %v577
    %991 = vmatpush1.msra.mxu0 %v576
    %992 = vmatprep.subr.mxu0 %v573
    %993 = vmatpush1.msra.mxu0 %v572
    %994 = vmatprep.subr.mxu0 %v569
    %995 = vmatpush1.msra.mxu0 %v568
    %996 = vmatprep.subr.mxu0 %v565
    %997 = vmatpush1.msra.mxu0 %v564
    %998 = vmatprep.subr.mxu0 %v561
    %999 = vmatpush1.msra.mxu0 %v560
    %1000 = vmatprep.subr.mxu0 %v557
    %1001 = vmatpush1.msra.mxu0 %v556
    %1002 = vmatprep.subr.mxu0 %v553
    %1003 = vmatpush1.msra.mxu0 %v552
    %1004 = vmatprep.subr.mxu0 %v549
    %1005 = vmatpush1.msra.mxu0 %v548
    %1006 = vmatprep.subr.mxu0 %v545
    %1007 = vmatpush1.msra.mxu0 %v544
    %1008 = vmatprep.subr.mxu0 %v541
    %1009 = vmatpush1.msra.mxu0 %v540
    %1010 = vmatprep.subr.mxu0 %v537
    %1011 = vmatpush1.msra.mxu0 %v536
    %1012 = vmatprep.subr.mxu0 %v533
    %1013 = vmatpush1.msra.mxu0 %v532
    %1014 = vmatprep.subr.mxu0 %v529
    %1015 = vmatpush1.msra.mxu0 %v528
    %1016 = vmatprep.subr.mxu0 0.0
    %1017 = vmatpush2.msra.mxu0 0.0
    %1018 = vmatprep.subr.mxu0 0.0
    %1019 = vmatpush2.msra.mxu0 0.0
    %1020 = vmatprep.subr.mxu0 0.0
    %1021 = vmatpush2.msra.mxu0 0.0
    %1022 = vmatprep.subr.mxu0 0.0
    %1023 = vmatpush2.msra.mxu0 0.0
    %1024 = vmatprep.subr.mxu0 0.0
    %1025 = vmatpush2.msra.mxu0 0.0
    %1026 = vmatprep.subr.mxu0 0.0
    %1027 = vmatpush2.msra.mxu0 0.0
    %1028 = vmatprep.subr.mxu0 0.0
    %1029 = vmatpush2.msra.mxu0 0.0
    %1030 = vmatprep.subr.mxu0 0.0
    %1031 = vmatpush2.msra.mxu0 0.0
    %1032 = vmatprep.subr.mxu0 0.0
    %1033 = vmatpush2.msra.mxu0 0.0
    %1034 = vmatprep.subr.mxu0 0.0
    %1035 = vmatpush2.msra.mxu0 0.0
    %1036 = vmatprep.subr.mxu0 0.0
    %1037 = vmatpush2.msra.mxu0 0.0
    %1038 = vmatprep.subr.mxu0 0.0
    %1039 = vmatpush2.msra.mxu0 0.0
    %1040 = vmatprep.subr.mxu0 0.0
    %1041 = vmatpush2.msra.mxu0 0.0
    %1042 = vmatprep.subr.mxu0 0.0
    %1043 = vmatpush2.msra.mxu0 0.0
    %1044 = vmatprep.subr.mxu0 %v597
    %1045 = vmatpush2.msra.mxu0 %v596
    %1046 = vmatprep.subr.mxu0 %v593
    %1047 = vmatpush2.msra.mxu0 %v592
    %1048 = vmatprep.mubr.f32.mxu0 %v622
    %1049 = vmatmul.mubr.f32.gmra.mxu0 %v368
    %v1050 = vpop.f32.mrf.mxu0
    %v1051 = vadd.f32 %v938, %v1050
    %v1052 = vpop.f32.mrf.mxu0
    %v1053 = vadd.f32 %v940, %v1052
    %1054 = vmatprep.mubr.f32.mxu0 %v625
    %1055 = vmatmul.mubr.f32.gmra.mxu0 %v372
    %v1056 = vpop.f32.mrf.mxu0
    %v1057 = vadd.f32 %v944, %v1056
    %v1058 = vpop.f32.mrf.mxu0
    %v1059 = vadd.f32 %v946, %v1058
    %1060 = vmatprep.mubr.f32.mxu0 %v628
    %1061 = vmatmul.mubr.f32.gmra.mxu0 %v376
    %v1062 = vpop.f32.mrf.mxu0
    %v1063 = vadd.f32 %v950, %v1062
    %v1064 = vpop.f32.mrf.mxu0
    %v1065 = vadd.f32 %v952, %v1064
    %1066 = vmatprep.mubr.f32.mxu0 %v631
    %1067 = vmatmul.mubr.f32.gmra.mxu0 %v380
    %v1068 = vpop.f32.mrf.mxu0
    %v1069 = vadd.f32 %v956, %v1068
    %v1070 = vpop.f32.mrf.mxu0
    %v1071 = vadd.f32 %v958, %v1070
    %1072 = vmatprep.mubr.f32.mxu0 %v634
    %1073 = vmatmul.mubr.f32.gmra.mxu0 %v384
    %v1074 = vpop.f32.mrf.mxu0
    %v1075 = vadd.f32 %v962, %v1074
    %v1076 = vpop.f32.mrf.mxu0
    %v1077 = vadd.f32 %v964, %v1076
    %1078 = vmatprep.mubr.f32.mxu0 %v637
    %1079 = vmatmul.mubr.f32.gmra.mxu0 %v388
    %v1080 = vpop.f32.mrf.mxu0
    %v1081 = vadd.f32 %v968, %v1080
    %v1082 = vpop.f32.mrf.mxu0
    %v1083 = vadd.f32 %v970, %v1082
    %1084 = vmatprep.mubr.f32.mxu0 %v640
    %1085 = vmatmul.mubr.f32.gmra.mxu0 %v392
    %v1086 = vpop.f32.mrf.mxu0
    %v1087 = vadd.f32 %v974, %v1086
    %v1088 = vpop.f32.mrf.mxu0
    %v1089 = vadd.f32 %v976, %v1088
    %1090 = vmatprep.mubr.f32.mxu0 %v643
    %1091 = vmatmul.mubr.f32.gmra.mxu0 %v396
    %v1092 = vpop.f32.mrf.mxu0
    %v1093 = vadd.f32 %v980, %v1092
    %v1094 = vpop.f32.mrf.mxu0
    %v1095 = vadd.f32 %v982, %v1094
    %1096 = vdwg.mxu0
    %v1097 = vmax.f32 %v825, 0.0
    %v1098 = vmax.f32 %v827, 0.0
    %v1099 = vmax.f32 %v1051, 0.0
    %v1100 = vmax.f32 %v1053, 0.0
    %v1101 = vmax.f32 %v831, 0.0
    %v1102 = vmax.f32 %v833, 0.0
    %v1103 = vmax.f32 %v1057, 0.0
    %v1104 = vmax.f32 %v1059, 0.0
    %v1105 = vmax.f32 %v837, 0.0
    %v1106 = vmax.f32 %v839, 0.0
    %v1107 = vmax.f32 %v1063, 0.0
    %v1108 = vmax.f32 %v1065, 0.0
    %v1109 = vmax.f32 %v843, 0.0
    %v1110 = vmax.f32 %v845, 0.0
    %v1111 = vmax.f32 %v1069, 0.0
    %v1112 = vmax.f32 %v1071, 0.0
    %v1113 = vmax.f32 %v849, 0.0
    %v1114 = vmax.f32 %v851, 0.0
    %v1115 = vmax.f32 %v1075, 0.0
    %v1116 = vmax.f32 %v1077, 0.0
    %v1117 = vmax.f32 %v855, 0.0
    %v1118 = vmax.f32 %v857, 0.0
    %v1119 = vmax.f32 %v1081, 0.0
    %v1120 = vmax.f32 %v1083, 0.0
    %v1121 = vmax.f32 %v861, 0.0
    %v1122 = vmax.f32 %v863, 0.0
    %v1123 = vmax.f32 %v1087, 0.0
    %v1124 = vmax.f32 %v1089, 0.0
    %v1125 = vmax.f32 %v867, 0.0
    %v1126 = vmax.f32 %v869, 0.0
    %v1127 = vmax.f32 %v1093, 0.0
    %v1128 = vmax.f32 %v1095, 0.0
    %v1129 = vld [vmem:[#allocation5] sm:$0xff]
    %v1130 = vld [vmem:[#allocation5 + $0x8] sm:$0xff]
    %v1131 = vld [vmem:[#allocation5 + $0x10] sm:$0xff]
    %v1132 = vld [vmem:[#allocation5 + $0x18] sm:$0xff]
    %v1133 = vld [vmem:[#allocation5 + $0x20] sm:$0xff]
    %v1134 = vld [vmem:[#allocation5 + $0x28] sm:$0xff]
    %v1135 = vld [vmem:[#allocation5 + $0x30] sm:$0xff]
    %v1136 = vld [vmem:[#allocation5 + $0x38] sm:$0xff]
    %v1137 = vld [vmem:[#allocation5 + $0x40] sm:$0xff]
    %v1138 = vld [vmem:[#allocation5 + $0x48] sm:$0xff]
    %v1139 = vld [vmem:[#allocation5 + $0x50] sm:$0xff]
    %v1140 = vld [vmem:[#allocation5 + $0x58] sm:$0xff]
    %v1141 = vld [vmem:[#allocation5 + $0x60] sm:$0xff]
    %v1142 = vld [vmem:[#allocation5 + $0x68] sm:$0xff]
    %v1143 = vld [vmem:[#allocation5 + $0x70] sm:$0xff]
    %v1144 = vld [vmem:[#allocation5 + $0x78] sm:$0xff]
    %v1145 = vld [vmem:[#allocation5 + $0x80] sm:$0xff]
    %v1146 = vld [vmem:[#allocation5 + $0x88] sm:$0xff]
    %v1147 = vld [vmem:[#allocation5 + $0x90] sm:$0xff]
    %v1148 = vld [vmem:[#allocation5 + $0x98] sm:$0xff]
    %v1149 = vld [vmem:[#allocation5 + $0xa0] sm:$0xff]
    %v1150 = vld [vmem:[#allocation5 + $0xa8] sm:$0xff]
    %v1151 = vld [vmem:[#allocation5 + $0xb0] sm:$0xff]
    %v1152 = vld [vmem:[#allocation5 + $0xb8] sm:$0xff]
    %v1153 = vld [vmem:[#allocation5 + $0xc0] sm:$0xff]
    %v1154 = vld [vmem:[#allocation5 + $0xc8] sm:$0xff]
    %v1155 = vld [vmem:[#allocation5 + $0xd0] sm:$0xff]
    %v1156 = vld [vmem:[#allocation5 + $0xd8] sm:$0xff]
    %v1157 = vld [vmem:[#allocation5 + $0xe0] sm:$0xff]
    %v1158 = vld [vmem:[#allocation5 + $0xe8] sm:$0xff]
    %v1159 = vld [vmem:[#allocation5 + $0xf0] sm:$0xff]
    %v1160 = vld [vmem:[#allocation5 + $0xf8] sm:$0xff]
    %v1161 = vld [vmem:[#allocation5 + $0x100] sm:$0xff]
    %v1162 = vld [vmem:[#allocation5 + $0x108] sm:$0xff]
    %v1163 = vld [vmem:[#allocation5 + $0x110] sm:$0xff]
    %v1164 = vld [vmem:[#allocation5 + $0x118] sm:$0xff]
    %v1165 = vld [vmem:[#allocation5 + $0x120] sm:$0xff]
    %v1166 = vld [vmem:[#allocation5 + $0x128] sm:$0xff]
    %v1167 = vld [vmem:[#allocation5 + $0x130] sm:$0xff]
    %v1168 = vld [vmem:[#allocation5 + $0x138] sm:$0xff]
    %v1169 = vld [vmem:[#allocation5 + $0x140] sm:$0xff]
    %v1170 = vld [vmem:[#allocation5 + $0x148] sm:$0xff]
    %v1171 = vld [vmem:[#allocation5 + $0x150] sm:$0xff]
    %v1172 = vld [vmem:[#allocation5 + $0x158] sm:$0xff]
    %v1173 = vld [vmem:[#allocation5 + $0x160] sm:$0xff]
    %v1174 = vld [vmem:[#allocation5 + $0x168] sm:$0xff]
    %v1175 = vld [vmem:[#allocation5 + $0x170] sm:$0xff]
    %v1176 = vld [vmem:[#allocation5 + $0x178] sm:$0xff]
    %v1177 = vld [vmem:[#allocation5 + $0x180] sm:$0xff]
    %v1178 = vld [vmem:[#allocation5 + $0x188] sm:$0xff]
    %v1179 = vld [vmem:[#allocation5 + $0x190] sm:$0xff]
    %v1180 = vld [vmem:[#allocation5 + $0x198] sm:$0xff]
    %v1181 = vld [vmem:[#allocation5 + $0x1a0] sm:$0xff]
    %v1182 = vld [vmem:[#allocation5 + $0x1a8] sm:$0xff]
    %v1183 = vld [vmem:[#allocation5 + $0x1b0] sm:$0xff]
    %v1184 = vld [vmem:[#allocation5 + $0x1b8] sm:$0xff]
    %v1185 = vld [vmem:[#allocation5 + $0x1c0] sm:$0xff]
    %v1186 = vld [vmem:[#allocation5 + $0x1c8] sm:$0xff]
    %v1187 = vld [vmem:[#allocation5 + $0x1d0] sm:$0xff]
    %v1188 = vld [vmem:[#allocation5 + $0x1d8] sm:$0xff]
    %v1189 = vld [vmem:[#allocation5 + $0x1e0] sm:$0xff]
    %v1190 = vld [vmem:[#allocation5 + $0x1e8] sm:$0xff]
    %v1191 = vld [vmem:[#allocation5 + $0x1f0] sm:$0xff]
    %v1192 = vld [vmem:[#allocation5 + $0x1f8] sm:$0xff]
    %v1193 = vld [vmem:[#allocation5 + $0x200] sm:$0xff]
    %v1194 = vld [vmem:[#allocation5 + $0x208] sm:$0xff]
    %v1195 = vld [vmem:[#allocation5 + $0x210] sm:$0xff]
    %v1196 = vld [vmem:[#allocation5 + $0x218] sm:$0xff]
    %v1197 = vld [vmem:[#allocation5 + $0x220] sm:$0xff]
    %v1198 = vld [vmem:[#allocation5 + $0x228] sm:$0xff]
    %v1199 = vld [vmem:[#allocation5 + $0x230] sm:$0xff]
    %v1200 = vld [vmem:[#allocation5 + $0x238] sm:$0xff]
    %v1201 = vld [vmem:[#allocation5 + $0x240] sm:$0xff]
    %v1202 = vld [vmem:[#allocation5 + $0x248] sm:$0xff]
    %v1203 = vld [vmem:[#allocation5 + $0x250] sm:$0xff]
    %v1204 = vld [vmem:[#allocation5 + $0x258] sm:$0xff]
    %v1205 = vld [vmem:[#allocation5 + $0x260] sm:$0xff]
    %v1206 = vld [vmem:[#allocation5 + $0x268] sm:$0xff]
    %v1207 = vld [vmem:[#allocation5 + $0x270] sm:$0xff]
    %v1208 = vld [vmem:[#allocation5 + $0x278] sm:$0xff]
    %v1209 = vld [vmem:[#allocation5 + $0x280] sm:$0xff]
    %v1210 = vld [vmem:[#allocation5 + $0x288] sm:$0xff]
    %v1211 = vld [vmem:[#allocation5 + $0x290] sm:$0xff]
    %v1212 = vld [vmem:[#allocation5 + $0x298] sm:$0xff]
    %v1213 = vld [vmem:[#allocation5 + $0x2a0] sm:$0xff]
    %v1214 = vld [vmem:[#allocation5 + $0x2a8] sm:$0xff]
    %v1215 = vld [vmem:[#allocation5 + $0x2b0] sm:$0xff]
    %v1216 = vld [vmem:[#allocation5 + $0x2b8] sm:$0xff]
    %v1217 = vld [vmem:[#allocation5 + $0x2c0] sm:$0xff]
    %v1218 = vld [vmem:[#allocation5 + $0x2c8] sm:$0xff]
    %v1219 = vld [vmem:[#allocation5 + $0x2d0] sm:$0xff]
    %v1220 = vld [vmem:[#allocation5 + $0x2d8] sm:$0xff]
    %v1221 = vld [vmem:[#allocation5 + $0x2e0] sm:$0xff]
    %v1222 = vld [vmem:[#allocation5 + $0x2e8] sm:$0xff]
    %v1223 = vld [vmem:[#allocation5 + $0x2f0] sm:$0xff]
    %v1224 = vld [vmem:[#allocation5 + $0x2f8] sm:$0xff]
    %v1225 = vld [vmem:[#allocation5 + $0x300] sm:$0xff]
    %v1226 = vld [vmem:[#allocation5 + $0x308] sm:$0xff]
    %v1227 = vld [vmem:[#allocation5 + $0x310] sm:$0xff]
    %v1228 = vld [vmem:[#allocation5 + $0x318] sm:$0xff]
    %v1229 = vld [vmem:[#allocation5 + $0x320] sm:$0xff]
    %v1230 = vld [vmem:[#allocation5 + $0x328] sm:$0xff]
    %v1231 = vld [vmem:[#allocation5 + $0x330] sm:$0xff]
    %v1232 = vld [vmem:[#allocation5 + $0x338] sm:$0xff]
    %v1233 = vld [vmem:[#allocation5 + $0x340] sm:$0xff]
    %v1234 = vld [vmem:[#allocation5 + $0x348] sm:$0xff]
    %v1235 = vld [vmem:[#allocation5 + $0x350] sm:$0xff]
    %v1236 = vld [vmem:[#allocation5 + $0x358] sm:$0xff]
    %v1237 = vld [vmem:[#allocation5 + $0x360] sm:$0xff]
    %v1238 = vld [vmem:[#allocation5 + $0x368] sm:$0xff]
    %v1239 = vld [vmem:[#allocation5 + $0x370] sm:$0xff]
    %v1240 = vld [vmem:[#allocation5 + $0x378] sm:$0xff]
    %v1241 = vld [vmem:[#allocation5 + $0x380] sm:$0xff]
    %v1242 = vld [vmem:[#allocation5 + $0x388] sm:$0xff]
    %v1243 = vld [vmem:[#allocation5 + $0x390] sm:$0xff]
    %v1244 = vld [vmem:[#allocation5 + $0x398] sm:$0xff]
    %v1245 = vld [vmem:[#allocation5 + $0x3a0] sm:$0xff]
    %v1246 = vld [vmem:[#allocation5 + $0x3a8] sm:$0xff]
    %v1247 = vld [vmem:[#allocation5 + $0x3b0] sm:$0xff]
    %v1248 = vld [vmem:[#allocation5 + $0x3b8] sm:$0xff]
    %v1249 = vld [vmem:[#allocation5 + $0x3c0] sm:$0xff]
    %v1250 = vld [vmem:[#allocation5 + $0x3c8] sm:$0xff]
    %v1251 = vld [vmem:[#allocation5 + $0x3d0] sm:$0xff]
    %v1252 = vld [vmem:[#allocation5 + $0x3d8] sm:$0xff]
    %v1253 = vld [vmem:[#allocation5 + $0x3e0] sm:$0xff]
    %v1254 = vld [vmem:[#allocation5 + $0x3e8] sm:$0xff]
    %v1255 = vld [vmem:[#allocation5 + $0x3f0] sm:$0xff]
    %v1256 = vld [vmem:[#allocation5 + $0x3f8] sm:$0xff]
    %v1257 = vld [vmem:[#allocation5 + $0x400] sm:$0xff]
    %v1258 = vld [vmem:[#allocation5 + $0x408] sm:$0xff]
    %v1259 = vld [vmem:[#allocation5 + $0x410] sm:$0xff]
    %v1260 = vld [vmem:[#allocation5 + $0x418] sm:$0xff]
    %v1261 = vld [vmem:[#allocation5 + $0x420] sm:$0xff]
    %v1262 = vld [vmem:[#allocation5 + $0x428] sm:$0xff]
    %v1263 = vld [vmem:[#allocation5 + $0x430] sm:$0xff]
    %v1264 = vld [vmem:[#allocation5 + $0x438] sm:$0xff]
    %v1265 = vld [vmem:[#allocation5 + $0x440] sm:$0xff]
    %v1266 = vld [vmem:[#allocation5 + $0x448] sm:$0xff]
    %v1267 = vld [vmem:[#allocation5 + $0x450] sm:$0xff]
    %v1268 = vld [vmem:[#allocation5 + $0x458] sm:$0xff]
    %v1269 = vld [vmem:[#allocation5 + $0x460] sm:$0xff]
    %v1270 = vld [vmem:[#allocation5 + $0x468] sm:$0xff]
    %v1271 = vld [vmem:[#allocation5 + $0x470] sm:$0xff]
    %v1272 = vld [vmem:[#allocation5 + $0x478] sm:$0xff]
    %v1273 = vld [vmem:[#allocation5 + $0x480] sm:$0xff]
    %v1274 = vld [vmem:[#allocation5 + $0x488] sm:$0xff]
    %v1275 = vld [vmem:[#allocation5 + $0x490] sm:$0xff]
    %v1276 = vld [vmem:[#allocation5 + $0x498] sm:$0xff]
    %v1277 = vld [vmem:[#allocation5 + $0x4a0] sm:$0xff]
    %v1278 = vld [vmem:[#allocation5 + $0x4a8] sm:$0xff]
    %v1279 = vld [vmem:[#allocation5 + $0x4b0] sm:$0xff]
    %v1280 = vld [vmem:[#allocation5 + $0x4b8] sm:$0xff]
    %v1281 = vld [vmem:[#allocation5 + $0x4c0] sm:$0xff]
    %v1282 = vld [vmem:[#allocation5 + $0x4c8] sm:$0xff]
    %v1283 = vld [vmem:[#allocation5 + $0x4d0] sm:$0xff]
    %v1284 = vld [vmem:[#allocation5 + $0x4d8] sm:$0xff]
    %v1285 = vld [vmem:[#allocation5 + $0x4e0] sm:$0xff]
    %v1286 = vld [vmem:[#allocation5 + $0x4e8] sm:$0xff]
    %v1287 = vld [vmem:[#allocation5 + $0x4f0] sm:$0xff]
    %v1288 = vld [vmem:[#allocation5 + $0x4f8] sm:$0xff]
    %v1289 = vld [vmem:[#allocation5 + $0x500] sm:$0xff]
    %v1290 = vld [vmem:[#allocation5 + $0x508] sm:$0xff]
    %v1291 = vld [vmem:[#allocation5 + $0x510] sm:$0xff]
    %v1292 = vld [vmem:[#allocation5 + $0x518] sm:$0xff]
    %v1293 = vld [vmem:[#allocation5 + $0x520] sm:$0xff]
    %v1294 = vld [vmem:[#allocation5 + $0x528] sm:$0xff]
    %v1295 = vld [vmem:[#allocation5 + $0x530] sm:$0xff]
    %v1296 = vld [vmem:[#allocation5 + $0x538] sm:$0xff]
    %v1297 = vld [vmem:[#allocation5 + $0x540] sm:$0xff]
    %v1298 = vld [vmem:[#allocation5 + $0x548] sm:$0xff]
    %v1299 = vld [vmem:[#allocation5 + $0x550] sm:$0xff]
    %v1300 = vld [vmem:[#allocation5 + $0x558] sm:$0xff]
    %v1301 = vld [vmem:[#allocation5 + $0x560] sm:$0xff]
    %v1302 = vld [vmem:[#allocation5 + $0x568] sm:$0xff]
    %v1303 = vld [vmem:[#allocation5 + $0x570] sm:$0xff]
    %v1304 = vld [vmem:[#allocation5 + $0x578] sm:$0xff]
    %v1305 = vld [vmem:[#allocation5 + $0x580] sm:$0xff]
    %v1306 = vld [vmem:[#allocation5 + $0x588] sm:$0xff]
    %v1307 = vld [vmem:[#allocation5 + $0x590] sm:$0xff]
    %v1308 = vld [vmem:[#allocation5 + $0x598] sm:$0xff]
    %v1309 = vld [vmem:[#allocation5 + $0x5a0] sm:$0xff]
    %v1310 = vld [vmem:[#allocation5 + $0x5a8] sm:$0xff]
    %v1311 = vld [vmem:[#allocation5 + $0x5b0] sm:$0xff]
    %v1312 = vld [vmem:[#allocation5 + $0x5b8] sm:$0xff]
    %v1313 = vld [vmem:[#allocation5 + $0x5c0] sm:$0xff]
    %v1314 = vld [vmem:[#allocation5 + $0x5c8] sm:$0xff]
    %v1315 = vld [vmem:[#allocation5 + $0x5d0] sm:$0xff]
    %v1316 = vld [vmem:[#allocation5 + $0x5d8] sm:$0xff]
    %v1317 = vld [vmem:[#allocation5 + $0x5e0] sm:$0xff]
    %v1318 = vld [vmem:[#allocation5 + $0x5e8] sm:$0xff]
    %v1319 = vld [vmem:[#allocation5 + $0x5f0] sm:$0xff]
    %v1320 = vld [vmem:[#allocation5 + $0x5f8] sm:$0xff]
    %v1321 = vld [vmem:[#allocation5 + $0x600] sm:$0xff]
    %v1322 = vld [vmem:[#allocation5 + $0x608] sm:$0xff]
    %v1323 = vld [vmem:[#allocation5 + $0x610] sm:$0xff]
    %v1324 = vld [vmem:[#allocation5 + $0x618] sm:$0xff]
    %v1325 = vld [vmem:[#allocation5 + $0x620] sm:$0xff]
    %v1326 = vld [vmem:[#allocation5 + $0x628] sm:$0xff]
    %v1327 = vld [vmem:[#allocation5 + $0x630] sm:$0xff]
    %v1328 = vld [vmem:[#allocation5 + $0x638] sm:$0xff]
    %v1329 = vld [vmem:[%s6] sm:$0xf]
    %v1331 = vlaneseq
    %v1332 = vshrl.u32 %v1331, 7
    %v1333 = vsub.s32 0, %v1332
    %v1334 = vrot.slane %v1329, %v1333
    %v1335 = vlaneseq
    %v1336 = vshrl.u32 %v1335, 7
    %v1337 = vsub.s32 1, %v1336
    %v1338 = vrot.slane %v1329, %v1337
    %v1339 = vlaneseq
    %v1340 = vshrl.u32 %v1339, 7
    %v1341 = vsub.s32 2, %v1340
    %v1342 = vrot.slane %v1329, %v1341
    %v1343 = vlaneseq
    %v1344 = vshrl.u32 %v1343, 7
    %v1345 = vsub.s32 3, %v1344
    %v1346 = vrot.slane %v1329, %v1345
    %v1352 = vsel %vm620, %v1100, 0
    %v1355 = vsel %vm620, %v1104, 0
    %v1358 = vsel %vm620, %v1108, 0
    %v1361 = vsel %vm620, %v1112, 0
    %v1364 = vsel %vm620, %v1116, 0
    %v1367 = vsel %vm620, %v1120, 0
    %v1370 = vsel %vm620, %v1124, 0
    %v1373 = vsel %vm620, %v1128, 0
    %1375 = vmatprep.subr.mxu0 %v1190
    %1376 = vmatpush1.msra.mxu0 %v1189
    %1377 = vmatprep.subr.mxu0 %v1186
    %1378 = vmatpush1.msra.mxu0 %v1185
    %1379 = vmatprep.subr.mxu0 %v1182
    %1380 = vmatpush1.msra.mxu0 %v1181
    %1381 = vmatprep.subr.mxu0 %v1178
    %1382 = vmatpush1.msra.mxu0 %v1177
    %1383 = vmatprep.subr.mxu0 %v1174
    %1384 = vmatpush1.msra.mxu0 %v1173
    %1385 = vmatprep.subr.mxu0 %v1170
    %1386 = vmatpush1.msra.mxu0 %v1169
    %1387 = vmatprep.subr.mxu0 %v1166
    %1388 = vmatpush1.msra.mxu0 %v1165
    %1389 = vmatprep.subr.mxu0 %v1162
    %1390 = vmatpush1.msra.mxu0 %v1161
    %1391 = vmatprep.subr.mxu0 %v1158
    %1392 = vmatpush1.msra.mxu0 %v1157
    %1393 = vmatprep.subr.mxu0 %v1154
    %1394 = vmatpush1.msra.mxu0 %v1153
    %1395 = vmatprep.subr.mxu0 %v1150
    %1396 = vmatpush1.msra.mxu0 %v1149
    %1397 = vmatprep.subr.mxu0 %v1146
    %1398 = vmatpush1.msra.mxu0 %v1145
    %1399 = vmatprep.subr.mxu0 %v1142
    %1400 = vmatpush1.msra.mxu0 %v1141
    %1401 = vmatprep.subr.mxu0 %v1138
    %1402 = vmatpush1.msra.mxu0 %v1137
    %1403 = vmatprep.subr.mxu0 %v1134
    %1404 = vmatpush1.msra.mxu0 %v1133
    %1405 = vmatprep.subr.mxu0 %v1130
    %1406 = vmatpush1.msra.mxu0 %v1129
    %1407 = vmatprep.subr.mxu0 %v1254
    %1408 = vmatpush2.msra.mxu0 %v1253
    %1409 = vmatprep.subr.mxu0 %v1250
    %1410 = vmatpush2.msra.mxu0 %v1249
    %1411 = vmatprep.subr.mxu0 %v1246
    %1412 = vmatpush2.msra.mxu0 %v1245
    %1413 = vmatprep.subr.mxu0 %v1242
    %1414 = vmatpush2.msra.mxu0 %v1241
    %1415 = vmatprep.subr.mxu0 %v1238
    %1416 = vmatpush2.msra.mxu0 %v1237
    %1417 = vmatprep.subr.mxu0 %v1234
    %1418 = vmatpush2.msra.mxu0 %v1233
    %1419 = vmatprep.subr.mxu0 %v1230
    %1420 = vmatpush2.msra.mxu0 %v1229
    %1421 = vmatprep.subr.mxu0 %v1226
    %1422 = vmatpush2.msra.mxu0 %v1225
    %1423 = vmatprep.subr.mxu0 %v1222
    %1424 = vmatpush2.msra.mxu0 %v1221
    %1425 = vmatprep.subr.mxu0 %v1218
    %1426 = vmatpush2.msra.mxu0 %v1217
    %1427 = vmatprep.subr.mxu0 %v1214
    %1428 = vmatpush2.msra.mxu0 %v1213
    %1429 = vmatprep.subr.mxu0 %v1210
    %1430 = vmatpush2.msra.mxu0 %v1209
    %1431 = vmatprep.subr.mxu0 %v1206
    %1432 = vmatpush2.msra.mxu0 %v1205
    %1433 = vmatprep.subr.mxu0 %v1202
    %1434 = vmatpush2.msra.mxu0 %v1201
    %1435 = vmatprep.subr.mxu0 %v1198
    %1436 = vmatpush2.msra.mxu0 %v1197
    %1437 = vmatprep.subr.mxu0 %v1194
    %1438 = vmatpush2.msra.mxu0 %v1193
    %1439 = vmatprep.mubr.f32.mxu0 %v1098
    %1440 = vmatmul.mubr.f32.gmra.mxu0 %v1097
    %v1441 = vpop.f32.mrf.mxu0
    %v1442 = vadd.f32 %v1334, %v1441
    %v1443 = vpop.f32.mrf.mxu0
    %v1444 = vadd.f32 %v1338, %v1443
    %1445 = vmatprep.mubr.f32.mxu0 %v1102
    %1446 = vmatmul.mubr.f32.gmra.mxu0 %v1101
    %v1447 = vpop.f32.mrf.mxu0
    %v1448 = vadd.f32 %v1334, %v1447
    %v1449 = vpop.f32.mrf.mxu0
    %v1450 = vadd.f32 %v1338, %v1449
    %1451 = vmatprep.mubr.f32.mxu0 %v1106
    %1452 = vmatmul.mubr.f32.gmra.mxu0 %v1105
    %v1453 = vpop.f32.mrf.mxu0
    %v1454 = vadd.f32 %v1334, %v1453
    %v1455 = vpop.f32.mrf.mxu0
    %v1456 = vadd.f32 %v1338, %v1455
    %1457 = vmatprep.mubr.f32.mxu0 %v1110
    %1458 = vmatmul.mubr.f32.gmra.mxu0 %v1109
    %v1459 = vpop.f32.mrf.mxu0
    %v1460 = vadd.f32 %v1334, %v1459
    %v1461 = vpop.f32.mrf.mxu0
    %v1462 = vadd.f32 %v1338, %v1461
    %1463 = vmatprep.mubr.f32.mxu0 %v1114
    %1464 = vmatmul.mubr.f32.gmra.mxu0 %v1113
    %v1465 = vpop.f32.mrf.mxu0
    %v1466 = vadd.f32 %v1334, %v1465
    %v1467 = vpop.f32.mrf.mxu0
    %v1468 = vadd.f32 %v1338, %v1467
    %1469 = vmatprep.mubr.f32.mxu0 %v1118
    %1470 = vmatmul.mubr.f32.gmra.mxu0 %v1117
    %v1471 = vpop.f32.mrf.mxu0
    %v1472 = vadd.f32 %v1334, %v1471
    %v1473 = vpop.f32.mrf.mxu0
    %v1474 = vadd.f32 %v1338, %v1473
    %1475 = vmatprep.mubr.f32.mxu0 %v1122
    %1476 = vmatmul.mubr.f32.gmra.mxu0 %v1121
    %v1477 = vpop.f32.mrf.mxu0
    %v1478 = vadd.f32 %v1334, %v1477
    %v1479 = vpop.f32.mrf.mxu0
    %v1480 = vadd.f32 %v1338, %v1479
    %1481 = vmatprep.mubr.f32.mxu0 %v1126
    %1482 = vmatmul.mubr.f32.gmra.mxu0 %v1125
    %v1483 = vpop.f32.mrf.mxu0
    %v1484 = vadd.f32 %v1334, %v1483
    %v1485 = vpop.f32.mrf.mxu0
    %v1486 = vadd.f32 %v1338, %v1485
    %1487 = vdwg.mxu0
    %1488 = vmatprep.subr.mxu0 %v1318
    %1489 = vmatpush1.msra.mxu0 %v1317
    %1490 = vmatprep.subr.mxu0 %v1314
    %1491 = vmatpush1.msra.mxu0 %v1313
    %1492 = vmatprep.subr.mxu0 %v1310
    %1493 = vmatpush1.msra.mxu0 %v1309
    %1494 = vmatprep.subr.mxu0 %v1306
    %1495 = vmatpush1.msra.mxu0 %v1305
    %1496 = vmatprep.subr.mxu0 %v1302
    %1497 = vmatpush1.msra.mxu0 %v1301
    %1498 = vmatprep.subr.mxu0 %v1298
    %1499 = vmatpush1.msra.mxu0 %v1297
    %1500 = vmatprep.subr.mxu0 %v1294
    %1501 = vmatpush1.msra.mxu0 %v1293
    %1502 = vmatprep.subr.mxu0 %v1290
    %1503 = vmatpush1.msra.mxu0 %v1289
    %1504 = vmatprep.subr.mxu0 %v1286
    %1505 = vmatpush1.msra.mxu0 %v1285
    %1506 = vmatprep.subr.mxu0 %v1282
    %1507 = vmatpush1.msra.mxu0 %v1281
    %1508 = vmatprep.subr.mxu0 %v1278
    %1509 = vmatpush1.msra.mxu0 %v1277
    %1510 = vmatprep.subr.mxu0 %v1274
    %1511 = vmatpush1.msra.mxu0 %v1273
    %1512 = vmatprep.subr.mxu0 %v1270
    %1513 = vmatpush1.msra.mxu0 %v1269
    %1514 = vmatprep.subr.mxu0 %v1266
    %1515 = vmatpush1.msra.mxu0 %v1265
    %1516 = vmatprep.subr.mxu0 %v1262
    %1517 = vmatpush1.msra.mxu0 %v1261
    %1518 = vmatprep.subr.mxu0 %v1258
    %1519 = vmatpush1.msra.mxu0 %v1257
    %1520 = vmatprep.subr.mxu0 0.0
    %1521 = vmatpush2.msra.mxu0 0.0
    %1522 = vmatprep.subr.mxu0 0.0
    %1523 = vmatpush2.msra.mxu0 0.0
    %1524 = vmatprep.subr.mxu0 0.0
    %1525 = vmatpush2.msra.mxu0 0.0
    %1526 = vmatprep.subr.mxu0 0.0
    %1527 = vmatpush2.msra.mxu0 0.0
    %1528 = vmatprep.subr.mxu0 0.0
    %1529 = vmatpush2.msra.mxu0 0.0
    %1530 = vmatprep.subr.mxu0 0.0
    %1531 = vmatpush2.msra.mxu0 0.0
    %1532 = vmatprep.subr.mxu0 0.0
    %1533 = vmatpush2.msra.mxu0 0.0
    %1534 = vmatprep.subr.mxu0 0.0
    %1535 = vmatpush2.msra.mxu0 0.0
    %1536 = vmatprep.subr.mxu0 0.0
    %1537 = vmatpush2.msra.mxu0 0.0
    %1538 = vmatprep.subr.mxu0 0.0
    %1539 = vmatpush2.msra.mxu0 0.0
    %1540 = vmatprep.subr.mxu0 0.0
    %1541 = vmatpush2.msra.mxu0 0.0
    %1542 = vmatprep.subr.mxu0 0.0
    %1543 = vmatpush2.msra.mxu0 0.0
    %1544 = vmatprep.subr.mxu0 0.0
    %1545 = vmatpush2.msra.mxu0 0.0
    %1546 = vmatprep.subr.mxu0 0.0
    %1547 = vmatpush2.msra.mxu0 0.0
    %1548 = vmatprep.subr.mxu0 %v1326
    %1549 = vmatpush2.msra.mxu0 %v1325
    %1550 = vmatprep.subr.mxu0 %v1322
    %1551 = vmatpush2.msra.mxu0 %v1321
    %1552 = vmatprep.mubr.f32.mxu0 %v1352
    %1553 = vmatmul.mubr.f32.gmra.mxu0 %v1099
    %v1554 = vpop.f32.mrf.mxu0
    %v1555 = vadd.f32 %v1442, %v1554
    %v1556 = vpop.f32.mrf.mxu0
    %v1557 = vadd.f32 %v1444, %v1556
    %1558 = vmatprep.mubr.f32.mxu0 %v1355
    %1559 = vmatmul.mubr.f32.gmra.mxu0 %v1103
    %v1560 = vpop.f32.mrf.mxu0
    %v1561 = vadd.f32 %v1448, %v1560
    %v1562 = vpop.f32.mrf.mxu0
    %v1563 = vadd.f32 %v1450, %v1562
    %1564 = vmatprep.mubr.f32.mxu0 %v1358
    %1565 = vmatmul.mubr.f32.gmra.mxu0 %v1107
    %v1566 = vpop.f32.mrf.mxu0
    %v1567 = vadd.f32 %v1454, %v1566
    %v1568 = vpop.f32.mrf.mxu0
    %v1569 = vadd.f32 %v1456, %v1568
    %1570 = vmatprep.mubr.f32.mxu0 %v1361
    %1571 = vmatmul.mubr.f32.gmra.mxu0 %v1111
    %v1572 = vpop.f32.mrf.mxu0
    %v1573 = vadd.f32 %v1460, %v1572
    %v1574 = vpop.f32.mrf.mxu0
    %v1575 = vadd.f32 %v1462, %v1574
    %1576 = vmatprep.mubr.f32.mxu0 %v1364
    %1577 = vmatmul.mubr.f32.gmra.mxu0 %v1115
    %v1578 = vpop.f32.mrf.mxu0
    %v1579 = vadd.f32 %v1466, %v1578
    %v1580 = vpop.f32.mrf.mxu0
    %v1581 = vadd.f32 %v1468, %v1580
    %1582 = vmatprep.mubr.f32.mxu0 %v1367
    %1583 = vmatmul.mubr.f32.gmra.mxu0 %v1119
    %v1584 = vpop.f32.mrf.mxu0
    %v1585 = vadd.f32 %v1472, %v1584
    %v1586 = vpop.f32.mrf.mxu0
    %v1587 = vadd.f32 %v1474, %v1586
    %1588 = vmatprep.mubr.f32.mxu0 %v1370
    %1589 = vmatmul.mubr.f32.gmra.mxu0 %v1123
    %v1590 = vpop.f32.mrf.mxu0
    %v1591 = vadd.f32 %v1478, %v1590
    %v1592 = vpop.f32.mrf.mxu0
    %v1593 = vadd.f32 %v1480, %v1592
    %1594 = vmatprep.mubr.f32.mxu0 %v1373
    %1595 = vmatmul.mubr.f32.gmra.mxu0 %v1127
    %v1596 = vpop.f32.mrf.mxu0
    %v1597 = vadd.f32 %v1484, %v1596
    %v1598 = vpop.f32.mrf.mxu0
    %v1599 = vadd.f32 %v1486, %v1598
    %1600 = vdwg.mxu0
    %1601 = vmatprep.subr.mxu0 %v1192
    %1602 = vmatpush1.msra.mxu0 %v1191
    %1603 = vmatprep.subr.mxu0 %v1188
    %1604 = vmatpush1.msra.mxu0 %v1187
    %1605 = vmatprep.subr.mxu0 %v1184
    %1606 = vmatpush1.msra.mxu0 %v1183
    %1607 = vmatprep.subr.mxu0 %v1180
    %1608 = vmatpush1.msra.mxu0 %v1179
    %1609 = vmatprep.subr.mxu0 %v1176
    %1610 = vmatpush1.msra.mxu0 %v1175
    %1611 = vmatprep.subr.mxu0 %v1172
    %1612 = vmatpush1.msra.mxu0 %v1171
    %1613 = vmatprep.subr.mxu0 %v1168
    %1614 = vmatpush1.msra.mxu0 %v1167
    %1615 = vmatprep.subr.mxu0 %v1164
    %1616 = vmatpush1.msra.mxu0 %v1163
    %1617 = vmatprep.subr.mxu0 %v1160
    %1618 = vmatpush1.msra.mxu0 %v1159
    %1619 = vmatprep.subr.mxu0 %v1156
    %1620 = vmatpush1.msra.mxu0 %v1155
    %1621 = vmatprep.subr.mxu0 %v1152
    %1622 = vmatpush1.msra.mxu0 %v1151
    %1623 = vmatprep.subr.mxu0 %v1148
    %1624 = vmatpush1.msra.mxu0 %v1147
    %1625 = vmatprep.subr.mxu0 %v1144
    %1626 = vmatpush1.msra.mxu0 %v1143
    %1627 = vmatprep.subr.mxu0 %v1140
    %1628 = vmatpush1.msra.mxu0 %v1139
    %1629 = vmatprep.subr.mxu0 %v1136
    %1630 = vmatpush1.msra.mxu0 %v1135
    %1631 = vmatprep.subr.mxu0 %v1132
    %1632 = vmatpush1.msra.mxu0 %v1131
    %1633 = vmatprep.subr.mxu0 %v1256
    %1634 = vmatpush2.msra.mxu0 %v1255
    %1635 = vmatprep.subr.mxu0 %v1252
    %1636 = vmatpush2.msra.mxu0 %v1251
    %1637 = vmatprep.subr.mxu0 %v1248
    %1638 = vmatpush2.msra.mxu0 %v1247
    %1639 = vmatprep.subr.mxu0 %v1244
    %1640 = vmatpush2.msra.mxu0 %v1243
    %1641 = vmatprep.subr.mxu0 %v1240
    %1642 = vmatpush2.msra.mxu0 %v1239
    %1643 = vmatprep.subr.mxu0 %v1236
    %1644 = vmatpush2.msra.mxu0 %v1235
    %1645 = vmatprep.subr.mxu0 %v1232
    %1646 = vmatpush2.msra.mxu0 %v1231
    %1647 = vmatprep.subr.mxu0 %v1228
    %1648 = vmatpush2.msra.mxu0 %v1227
    %1649 = vmatprep.subr.mxu0 %v1224
    %1650 = vmatpush2.msra.mxu0 %v1223
    %1651 = vmatprep.subr.mxu0 %v1220
    %1652 = vmatpush2.msra.mxu0 %v1219
    %1653 = vmatprep.subr.mxu0 %v1216
    %1654 = vmatpush2.msra.mxu0 %v1215
    %1655 = vmatprep.subr.mxu0 %v1212
    %1656 = vmatpush2.msra.mxu0 %v1211
    %1657 = vmatprep.subr.mxu0 %v1208
    %1658 = vmatpush2.msra.mxu0 %v1207
    %1659 = vmatprep.subr.mxu0 %v1204
    %1660 = vmatpush2.msra.mxu0 %v1203
    %1661 = vmatprep.subr.mxu0 %v1200
    %1662 = vmatpush2.msra.mxu0 %v1199
    %1663 = vmatprep.subr.mxu0 %v1196
    %1664 = vmatpush2.msra.mxu0 %v1195
    %1665 = vmatprep.mubr.f32.mxu0 %v1098
    %1666 = vmatmul.mubr.f32.gmra.mxu0 %v1097
    %v1667 = vpop.f32.mrf.mxu0
    %v1668 = vadd.f32 %v1342, %v1667
    %v1669 = vpop.f32.mrf.mxu0
    %v1670 = vadd.f32 %v1346, %v1669
    %1671 = vmatprep.mubr.f32.mxu0 %v1102
    %1672 = vmatmul.mubr.f32.gmra.mxu0 %v1101
    %v1673 = vpop.f32.mrf.mxu0
    %v1674 = vadd.f32 %v1342, %v1673
    %v1675 = vpop.f32.mrf.mxu0
    %v1676 = vadd.f32 %v1346, %v1675
    %1677 = vmatprep.mubr.f32.mxu0 %v1106
    %1678 = vmatmul.mubr.f32.gmra.mxu0 %v1105
    %v1679 = vpop.f32.mrf.mxu0
    %v1680 = vadd.f32 %v1342, %v1679
    %v1681 = vpop.f32.mrf.mxu0
    %v1682 = vadd.f32 %v1346, %v1681
    %1683 = vmatprep.mubr.f32.mxu0 %v1110
    %1684 = vmatmul.mubr.f32.gmra.mxu0 %v1109
    %v1685 = vpop.f32.mrf.mxu0
    %v1686 = vadd.f32 %v1342, %v1685
    %v1687 = vpop.f32.mrf.mxu0
    %v1688 = vadd.f32 %v1346, %v1687
    %1689 = vmatprep.mubr.f32.mxu0 %v1114
    %1690 = vmatmul.mubr.f32.gmra.mxu0 %v1113
    %v1691 = vpop.f32.mrf.mxu0
    %v1692 = vadd.f32 %v1342, %v1691
    %v1693 = vpop.f32.mrf.mxu0
    %v1694 = vadd.f32 %v1346, %v1693
    %1695 = vmatprep.mubr.f32.mxu0 %v1118
    %1696 = vmatmul.mubr.f32.gmra.mxu0 %v1117
    %v1697 = vpop.f32.mrf.mxu0
    %v1698 = vadd.f32 %v1342, %v1697
    %v1699 = vpop.f32.mrf.mxu0
    %v1700 = vadd.f32 %v1346, %v1699
    %1701 = vmatprep.mubr.f32.mxu0 %v1122
    %1702 = vmatmul.mubr.f32.gmra.mxu0 %v1121
    %v1703 = vpop.f32.mrf.mxu0
    %v1704 = vadd.f32 %v1342, %v1703
    %v1705 = vpop.f32.mrf.mxu0
    %v1706 = vadd.f32 %v1346, %v1705
    %1707 = vmatprep.mubr.f32.mxu0 %v1126
    %1708 = vmatmul.mubr.f32.gmra.mxu0 %v1125
    %v1709 = vpop.f32.mrf.mxu0
    %v1710 = vadd.f32 %v1342, %v1709
    %v1711 = vpop.f32.mrf.mxu0
    %v1712 = vadd.f32 %v1346, %v1711
    %1713 = vdwg.mxu0
    %1714 = vmatprep.subr.mxu0 %v1320
    %1715 = vmatpush1.msra.mxu0 %v1319
    %1716 = vmatprep.subr.mxu0 %v1316
    %1717 = vmatpush1.msra.mxu0 %v1315
    %1718 = vmatprep.subr.mxu0 %v1312
    %1719 = vmatpush1.msra.mxu0 %v1311
    %1720 = vmatprep.subr.mxu0 %v1308
    %1721 = vmatpush1.msra.mxu0 %v1307
    %1722 = vmatprep.subr.mxu0 %v1304
    %1723 = vmatpush1.msra.mxu0 %v1303
    %1724 = vmatprep.subr.mxu0 %v1300
    %1725 = vmatpush1.msra.mxu0 %v1299
    %1726 = vmatprep.subr.mxu0 %v1296
    %1727 = vmatpush1.msra.mxu0 %v1295
    %1728 = vmatprep.subr.mxu0 %v1292
    %1729 = vmatpush1.msra.mxu0 %v1291
    %1730 = vmatprep.subr.mxu0 %v1288
    %1731 = vmatpush1.msra.mxu0 %v1287
    %1732 = vmatprep.subr.mxu0 %v1284
    %1733 = vmatpush1.msra.mxu0 %v1283
    %1734 = vmatprep.subr.mxu0 %v1280
    %1735 = vmatpush1.msra.mxu0 %v1279
    %1736 = vmatprep.subr.mxu0 %v1276
    %1737 = vmatpush1.msra.mxu0 %v1275
    %1738 = vmatprep.subr.mxu0 %v1272
    %1739 = vmatpush1.msra.mxu0 %v1271
    %1740 = vmatprep.subr.mxu0 %v1268
    %1741 = vmatpush1.msra.mxu0 %v1267
    %1742 = vmatprep.subr.mxu0 %v1264
    %1743 = vmatpush1.msra.mxu0 %v1263
    %1744 = vmatprep.subr.mxu0 %v1260
    %1745 = vmatpush1.msra.mxu0 %v1259
    %1746 = vmatprep.subr.mxu0 0.0
    %1747 = vmatpush2.msra.mxu0 0.0
    %1748 = vmatprep.subr.mxu0 0.0
    %1749 = vmatpush2.msra.mxu0 0.0
    %1750 = vmatprep.subr.mxu0 0.0
    %1751 = vmatpush2.msra.mxu0 0.0
    %1752 = vmatprep.subr.mxu0 0.0
    %1753 = vmatpush2.msra.mxu0 0.0
    %1754 = vmatprep.subr.mxu0 0.0
    %1755 = vmatpush2.msra.mxu0 0.0
    %1756 = vmatprep.subr.mxu0 0.0
    %1757 = vmatpush2.msra.mxu0 0.0
    %1758 = vmatprep.subr.mxu0 0.0
    %1759 = vmatpush2.msra.mxu0 0.0
    %1760 = vmatprep.subr.mxu0 0.0
    %1761 = vmatpush2.msra.mxu0 0.0
    %1762 = vmatprep.subr.mxu0 0.0
    %1763 = vmatpush2.msra.mxu0 0.0
    %1764 = vmatprep.subr.mxu0 0.0
    %1765 = vmatpush2.msra.mxu0 0.0
    %1766 = vmatprep.subr.mxu0 0.0
    %1767 = vmatpush2.msra.mxu0 0.0
    %1768 = vmatprep.subr.mxu0 0.0
    %1769 = vmatpush2.msra.mxu0 0.0
    %1770 = vmatprep.subr.mxu0 0.0
    %1771 = vmatpush2.msra.mxu0 0.0
    %1772 = vmatprep.subr.mxu0 0.0
    %1773 = vmatpush2.msra.mxu0 0.0
    %1774 = vmatprep.subr.mxu0 %v1328
    %1775 = vmatpush2.msra.mxu0 %v1327
    %1776 = vmatprep.subr.mxu0 %v1324
    %1777 = vmatpush2.msra.mxu0 %v1323
    %1778 = vmatprep.mubr.f32.mxu0 %v1352
    %1779 = vmatmul.mubr.f32.gmra.mxu0 %v1099
    %v1780 = vpop.f32.mrf.mxu0
    %v1781 = vadd.f32 %v1668, %v1780
    %v1782 = vpop.f32.mrf.mxu0
    %v1783 = vadd.f32 %v1670, %v1782
    %1784 = vmatprep.mubr.f32.mxu0 %v1355
    %1785 = vmatmul.mubr.f32.gmra.mxu0 %v1103
    %v1786 = vpop.f32.mrf.mxu0
    %v1787 = vadd.f32 %v1674, %v1786
    %v1788 = vpop.f32.mrf.mxu0
    %v1789 = vadd.f32 %v1676, %v1788
    %1790 = vmatprep.mubr.f32.mxu0 %v1358
    %1791 = vmatmul.mubr.f32.gmra.mxu0 %v1107
    %v1792 = vpop.f32.mrf.mxu0
    %v1793 = vadd.f32 %v1680, %v1792
    %v1794 = vpop.f32.mrf.mxu0
    %v1795 = vadd.f32 %v1682, %v1794
    %1796 = vmatprep.mubr.f32.mxu0 %v1361
    %1797 = vmatmul.mubr.f32.gmra.mxu0 %v1111
    %v1798 = vpop.f32.mrf.mxu0
    %v1799 = vadd.f32 %v1686, %v1798
    %v1800 = vpop.f32.mrf.mxu0
    %v1801 = vadd.f32 %v1688, %v1800
    %1802 = vmatprep.mubr.f32.mxu0 %v1364
    %1803 = vmatmul.mubr.f32.gmra.mxu0 %v1115
    %v1804 = vpop.f32.mrf.mxu0
    %v1805 = vadd.f32 %v1692, %v1804
    %v1806 = vpop.f32.mrf.mxu0
    %v1807 = vadd.f32 %v1694, %v1806
    %1808 = vmatprep.mubr.f32.mxu0 %v1367
    %1809 = vmatmul.mubr.f32.gmra.mxu0 %v1119
    %v1810 = vpop.f32.mrf.mxu0
    %v1811 = vadd.f32 %v1698, %v1810
    %v1812 = vpop.f32.mrf.mxu0
    %v1813 = vadd.f32 %v1700, %v1812
    %1814 = vmatprep.mubr.f32.mxu0 %v1370
    %1815 = vmatmul.mubr.f32.gmra.mxu0 %v1123
    %v1816 = vpop.f32.mrf.mxu0
    %v1817 = vadd.f32 %v1704, %v1816
    %v1818 = vpop.f32.mrf.mxu0
    %v1819 = vadd.f32 %v1706, %v1818
    %1820 = vmatprep.mubr.f32.mxu0 %v1373
    %1821 = vmatmul.mubr.f32.gmra.mxu0 %v1127
    %v1822 = vpop.f32.mrf.mxu0
    %v1823 = vadd.f32 %v1710, %v1822
    %v1824 = vpop.f32.mrf.mxu0
    %v1825 = vadd.f32 %v1712, %v1824
    %1826 = vdwg.mxu0
    %v1827 = vmax.f32 %v1555, 0.0
    %v1828 = vmax.f32 %v1557, 0.0
    %v1829 = vmax.f32 %v1781, 0.0
    %v1830 = vmax.f32 %v1783, 0.0
    %v1831 = vmax.f32 %v1561, 0.0
    %v1832 = vmax.f32 %v1563, 0.0
    %v1833 = vmax.f32 %v1787, 0.0
    %v1834 = vmax.f32 %v1789, 0.0
    %v1835 = vmax.f32 %v1567, 0.0
    %v1836 = vmax.f32 %v1569, 0.0
    %v1837 = vmax.f32 %v1793, 0.0
    %v1838 = vmax.f32 %v1795, 0.0
    %v1839 = vmax.f32 %v1573, 0.0
    %v1840 = vmax.f32 %v1575, 0.0
    %v1841 = vmax.f32 %v1799, 0.0
    %v1842 = vmax.f32 %v1801, 0.0
    %v1843 = vmax.f32 %v1579, 0.0
    %v1844 = vmax.f32 %v1581, 0.0
    %v1845 = vmax.f32 %v1805, 0.0
    %v1846 = vmax.f32 %v1807, 0.0
    %v1847 = vmax.f32 %v1585, 0.0
    %v1848 = vmax.f32 %v1587, 0.0
    %v1849 = vmax.f32 %v1811, 0.0
    %v1850 = vmax.f32 %v1813, 0.0
    %v1851 = vmax.f32 %v1591, 0.0
    %v1852 = vmax.f32 %v1593, 0.0
    %v1853 = vmax.f32 %v1817, 0.0
    %v1854 = vmax.f32 %v1819, 0.0
    %v1855 = vmax.f32 %v1597, 0.0
    %v1856 = vmax.f32 %v1599, 0.0
    %v1857 = vmax.f32 %v1823, 0.0
    %v1858 = vmax.f32 %v1825, 0.0
    %v1859 = vld [vmem:[%s7] sm:$0xff]
    %v1860 = vld [vmem:[%s7 + $0x8] sm:$0xff]
    %v1861 = vld [vmem:[%s7 + $0x10] sm:$0xff]
    %v1862 = vld [vmem:[%s7 + $0x18] sm:$0xff]
    %v1863 = vld [vmem:[%s7 + $0x20] sm:$0xff]
    %v1864 = vld [vmem:[%s7 + $0x28] sm:$0xff]
    %v1865 = vld [vmem:[%s7 + $0x30] sm:$0xff]
    %v1866 = vld [vmem:[%s7 + $0x38] sm:$0xff]
    %v1867 = vld [vmem:[%s7 + $0x40] sm:$0xff]
    %v1868 = vld [vmem:[%s7 + $0x48] sm:$0xff]
    %v1869 = vld [vmem:[%s7 + $0x50] sm:$0xff]
    %v1870 = vld [vmem:[%s7 + $0x58] sm:$0xff]
    %v1871 = vld [vmem:[%s7 + $0x60] sm:$0xff]
    %v1872 = vld [vmem:[%s7 + $0x68] sm:$0xff]
    %v1873 = vld [vmem:[%s7 + $0x70] sm:$0xff]
    %v1874 = vld [vmem:[%s7 + $0x78] sm:$0xff]
    %v1875 = vld [vmem:[%s7 + $0x80] sm:$0xff]
    %v1876 = vld [vmem:[%s7 + $0x88] sm:$0xff]
    %v1877 = vld [vmem:[%s7 + $0x90] sm:$0xff]
    %v1878 = vld [vmem:[%s7 + $0x98] sm:$0xff]
    %v1879 = vld [vmem:[%s7 + $0xa0] sm:$0xff]
    %v1880 = vld [vmem:[%s7 + $0xa8] sm:$0xff]
    %v1881 = vld [vmem:[%s7 + $0xb0] sm:$0xff]
    %v1882 = vld [vmem:[%s7 + $0xb8] sm:$0xff]
    %v1883 = vld [vmem:[%s7 + $0xc0] sm:$0xff]
    %v1884 = vld [vmem:[%s7 + $0xc8] sm:$0xff]
    %v1885 = vld [vmem:[%s7 + $0xd0] sm:$0xff]
    %v1886 = vld [vmem:[%s7 + $0xd8] sm:$0xff]
    %v1887 = vld [vmem:[%s7 + $0xe0] sm:$0xff]
    %v1888 = vld [vmem:[%s7 + $0xe8] sm:$0xff]
    %v1889 = vld [vmem:[%s7 + $0xf0] sm:$0xff]
    %v1890 = vld [vmem:[%s7 + $0xf8] sm:$0xff]
    %v1891 = vld [vmem:[%s7 + $0x100] sm:$0xff]
    %v1892 = vld [vmem:[%s7 + $0x108] sm:$0xff]
    %v1893 = vld [vmem:[%s7 + $0x110] sm:$0xff]
    %v1894 = vld [vmem:[%s7 + $0x118] sm:$0xff]
    %v1895 = vld [vmem:[%s7 + $0x120] sm:$0xff]
    %v1896 = vld [vmem:[%s7 + $0x128] sm:$0xff]
    %v1897 = vld [vmem:[%s7 + $0x130] sm:$0xff]
    %v1898 = vld [vmem:[%s7 + $0x138] sm:$0xff]
    %v1899 = vld [vmem:[%s7 + $0x140] sm:$0xff]
    %v1900 = vld [vmem:[%s7 + $0x148] sm:$0xff]
    %v1901 = vld [vmem:[%s7 + $0x150] sm:$0xff]
    %v1902 = vld [vmem:[%s7 + $0x158] sm:$0xff]
    %v1903 = vld [vmem:[%s7 + $0x160] sm:$0xff]
    %v1904 = vld [vmem:[%s7 + $0x168] sm:$0xff]
    %v1905 = vld [vmem:[%s7 + $0x170] sm:$0xff]
    %v1906 = vld [vmem:[%s7 + $0x178] sm:$0xff]
    %v1907 = vld [vmem:[%s7 + $0x180] sm:$0xff]
    %v1908 = vld [vmem:[%s7 + $0x188] sm:$0xff]
    %v1909 = vld [vmem:[#allocation2] sm:$0x1]
    %v1911 = vlaneseq
    %v1912 = vshrl.u32 %v1911, 7
    %v1913 = vsub.s32 0, %v1912
    %v1914 = vrot.slane %v1909, %v1913
    %v1917 = vsel %vm620, %v1830, 0
    %v1920 = vsel %vm620, %v1834, 0
    %v1923 = vsel %vm620, %v1838, 0
    %v1926 = vsel %vm620, %v1842, 0
    %v1929 = vsel %vm620, %v1846, 0
    %v1932 = vsel %vm620, %v1850, 0
    %v1935 = vsel %vm620, %v1854, 0
    %v1938 = vsel %vm620, %v1858, 0
    %1940 = vmatprep.subr.mxu0 0.0
    %1941 = vmatpush1.msra.mxu0 %v1874
    %1942 = vmatprep.subr.mxu0 0.0
    %1943 = vmatpush1.msra.mxu0 %v1873
    %1944 = vmatprep.subr.mxu0 0.0
    %1945 = vmatpush1.msra.mxu0 %v1872
    %1946 = vmatprep.subr.mxu0 0.0
    %1947 = vmatpush1.msra.mxu0 %v1871
    %1948 = vmatprep.subr.mxu0 0.0
    %1949 = vmatpush1.msra.mxu0 %v1870
    %1950 = vmatprep.subr.mxu0 0.0
    %1951 = vmatpush1.msra.mxu0 %v1869
    %1952 = vmatprep.subr.mxu0 0.0
    %1953 = vmatpush1.msra.mxu0 %v1868
    %1954 = vmatprep.subr.mxu0 0.0
    %1955 = vmatpush1.msra.mxu0 %v1867
    %1956 = vmatprep.subr.mxu0 0.0
    %1957 = vmatpush1.msra.mxu0 %v1866
    %1958 = vmatprep.subr.mxu0 0.0
    %1959 = vmatpush1.msra.mxu0 %v1865
    %1960 = vmatprep.subr.mxu0 0.0
    %1961 = vmatpush1.msra.mxu0 %v1864
    %1962 = vmatprep.subr.mxu0 0.0
    %1963 = vmatpush1.msra.mxu0 %v1863
    %1964 = vmatprep.subr.mxu0 0.0
    %1965 = vmatpush1.msra.mxu0 %v1862
    %1966 = vmatprep.subr.mxu0 0.0
    %1967 = vmatpush1.msra.mxu0 %v1861
    %1968 = vmatprep.subr.mxu0 0.0
    %1969 = vmatpush1.msra.mxu0 %v1860
    %1970 = vmatprep.subr.mxu0 0.0
    %1971 = vmatpush1.msra.mxu0 %v1859
    %1972 = vmatprep.subr.mxu0 0.0
    %1973 = vmatpush2.msra.mxu0 %v1890
    %1974 = vmatprep.subr.mxu0 0.0
    %1975 = vmatpush2.msra.mxu0 %v1889
    %1976 = vmatprep.subr.mxu0 0.0
    %1977 = vmatpush2.msra.mxu0 %v1888
    %1978 = vmatprep.subr.mxu0 0.0
    %1979 = vmatpush2.msra.mxu0 %v1887
    %1980 = vmatprep.subr.mxu0 0.0
    %1981 = vmatpush2.msra.mxu0 %v1886
    %1982 = vmatprep.subr.mxu0 0.0
    %1983 = vmatpush2.msra.mxu0 %v1885
    %1984 = vmatprep.subr.mxu0 0.0
    %1985 = vmatpush2.msra.mxu0 %v1884
    %1986 = vmatprep.subr.mxu0 0.0
    %1987 = vmatpush2.msra.mxu0 %v1883
    %1988 = vmatprep.subr.mxu0 0.0
    %1989 = vmatpush2.msra.mxu0 %v1882
    %1990 = vmatprep.subr.mxu0 0.0
    %1991 = vmatpush2.msra.mxu0 %v1881
    %1992 = vmatprep.subr.mxu0 0.0
    %1993 = vmatpush2.msra.mxu0 %v1880
    %1994 = vmatprep.subr.mxu0 0.0
    %1995 = vmatpush2.msra.mxu0 %v1879
    %1996 = vmatprep.subr.mxu0 0.0
    %1997 = vmatpush2.msra.mxu0 %v1878
    %1998 = vmatprep.subr.mxu0 0.0
    %1999 = vmatpush2.msra.mxu0 %v1877
    %2000 = vmatprep.subr.mxu0 0.0
    %2001 = vmatpush2.msra.mxu0 %v1876
    %2002 = vmatprep.subr.mxu0 0.0
    %2003 = vmatpush2.msra.mxu0 %v1875
    %2004 = vmatprep.mubr.f32.mxu0 %v1828
    %2005 = vmatmul.mubr.f32.gmra.mxu0 %v1827
    %v2006 = vpop.f32.mrf.mxu0
    %v2007 = vadd.f32 %v1914, %v2006
    %v2008 = vpop.f32.mrf.mxu0
    %2009 = vmatprep.mubr.f32.mxu0 %v1832
    %2010 = vmatmul.mubr.f32.gmra.mxu0 %v1831
    %v2011 = vpop.f32.mrf.mxu0
    %v2012 = vadd.f32 %v1914, %v2011
    %v2013 = vpop.f32.mrf.mxu0
    %2014 = vmatprep.mubr.f32.mxu0 %v1836
    %2015 = vmatmul.mubr.f32.gmra.mxu0 %v1835
    %v2016 = vpop.f32.mrf.mxu0
    %v2017 = vadd.f32 %v1914, %v2016
    %v2018 = vpop.f32.mrf.mxu0
    %2019 = vmatprep.mubr.f32.mxu0 %v1840
    %2020 = vmatmul.mubr.f32.gmra.mxu0 %v1839
    %v2021 = vpop.f32.mrf.mxu0
    %v2022 = vadd.f32 %v1914, %v2021
    %v2023 = vpop.f32.mrf.mxu0
    %2024 = vmatprep.mubr.f32.mxu0 %v1844
    %2025 = vmatmul.mubr.f32.gmra.mxu0 %v1843
    %v2026 = vpop.f32.mrf.mxu0
    %v2027 = vadd.f32 %v1914, %v2026
    %v2028 = vpop.f32.mrf.mxu0
    %2029 = vmatprep.mubr.f32.mxu0 %v1848
    %2030 = vmatmul.mubr.f32.gmra.mxu0 %v1847
    %v2031 = vpop.f32.mrf.mxu0
    %v2032 = vadd.f32 %v1914, %v2031
    %v2033 = vpop.f32.mrf.mxu0
    %2034 = vmatprep.mubr.f32.mxu0 %v1852
    %2035 = vmatmul.mubr.f32.gmra.mxu0 %v1851
    %v2036 = vpop.f32.mrf.mxu0
    %v2037 = vadd.f32 %v1914, %v2036
    %v2038 = vpop.f32.mrf.mxu0
    %2039 = vmatprep.mubr.f32.mxu0 %v1856
    %2040 = vmatmul.mubr.f32.gmra.mxu0 %v1855
    %v2041 = vpop.f32.mrf.mxu0
    %v2042 = vadd.f32 %v1914, %v2041
    %v2043 = vpop.f32.mrf.mxu0
    %2044 = vdwg.mxu0
    %2045 = vmatprep.subr.mxu0 0.0
    %2046 = vmatpush1.msra.mxu0 %v1906
    %2047 = vmatprep.subr.mxu0 0.0
    %2048 = vmatpush1.msra.mxu0 %v1905
    %2049 = vmatprep.subr.mxu0 0.0
    %2050 = vmatpush1.msra.mxu0 %v1904
    %2051 = vmatprep.subr.mxu0 0.0
    %2052 = vmatpush1.msra.mxu0 %v1903
    %2053 = vmatprep.subr.mxu0 0.0
    %2054 = vmatpush1.msra.mxu0 %v1902
    %2055 = vmatprep.subr.mxu0 0.0
    %2056 = vmatpush1.msra.mxu0 %v1901
    %2057 = vmatprep.subr.mxu0 0.0
    %2058 = vmatpush1.msra.mxu0 %v1900
    %2059 = vmatprep.subr.mxu0 0.0
    %2060 = vmatpush1.msra.mxu0 %v1899
    %2061 = vmatprep.subr.mxu0 0.0
    %2062 = vmatpush1.msra.mxu0 %v1898
    %2063 = vmatprep.subr.mxu0 0.0
    %2064 = vmatpush1.msra.mxu0 %v1897
    %2065 = vmatprep.subr.mxu0 0.0
    %2066 = vmatpush1.msra.mxu0 %v1896
    %2067 = vmatprep.subr.mxu0 0.0
    %2068 = vmatpush1.msra.mxu0 %v1895
    %2069 = vmatprep.subr.mxu0 0.0
    %2070 = vmatpush1.msra.mxu0 %v1894
    %2071 = vmatprep.subr.mxu0 0.0
    %2072 = vmatpush1.msra.mxu0 %v1893
    %2073 = vmatprep.subr.mxu0 0.0
    %2074 = vmatpush1.msra.mxu0 %v1892
    %2075 = vmatprep.subr.mxu0 0.0
    %2076 = vmatpush1.msra.mxu0 %v1891
    %2077 = vmatprep.subr.mxu0 0.0
    %2078 = vmatpush2.msra.mxu0 0.0
    %2079 = vmatprep.subr.mxu0 0.0
    %2080 = vmatpush2.msra.mxu0 0.0
    %2081 = vmatprep.subr.mxu0 0.0
    %2082 = vmatpush2.msra.mxu0 0.0
    %2083 = vmatprep.subr.mxu0 0.0
    %2084 = vmatpush2.msra.mxu0 0.0
    %2085 = vmatprep.subr.mxu0 0.0
    %2086 = vmatpush2.msra.mxu0 0.0
    %2087 = vmatprep.subr.mxu0 0.0
    %2088 = vmatpush2.msra.mxu0 0.0
    %2089 = vmatprep.subr.mxu0 0.0
    %2090 = vmatpush2.msra.mxu0 0.0
    %2091 = vmatprep.subr.mxu0 0.0
    %2092 = vmatpush2.msra.mxu0 0.0
    %2093 = vmatprep.subr.mxu0 0.0
    %2094 = vmatpush2.msra.mxu0 0.0
    %2095 = vmatprep.subr.mxu0 0.0
    %2096 = vmatpush2.msra.mxu0 0.0
    %2097 = vmatprep.subr.mxu0 0.0
    %2098 = vmatpush2.msra.mxu0 0.0
    %2099 = vmatprep.subr.mxu0 0.0
    %2100 = vmatpush2.msra.mxu0 0.0
    %2101 = vmatprep.subr.mxu0 0.0
    %2102 = vmatpush2.msra.mxu0 0.0
    %2103 = vmatprep.subr.mxu0 0.0
    %2104 = vmatpush2.msra.mxu0 0.0
    %2105 = vmatprep.subr.mxu0 0.0
    %2106 = vmatpush2.msra.mxu0 %v1908
    %2107 = vmatprep.subr.mxu0 0.0
    %2108 = vmatpush2.msra.mxu0 %v1907
    %2109 = vmatprep.mubr.f32.mxu0 %v1917
    %2110 = vmatmul.mubr.f32.gmra.mxu0 %v1829
    %v2111 = vpop.f32.mrf.mxu0
    %v2112 = vadd.f32 %v2007, %v2111
    %v2113 = vpop.f32.mrf.mxu0
    %2114 = vmatprep.mubr.f32.mxu0 %v1920
    %2115 = vmatmul.mubr.f32.gmra.mxu0 %v1833
    %v2116 = vpop.f32.mrf.mxu0
    %v2117 = vadd.f32 %v2012, %v2116
    %v2118 = vpop.f32.mrf.mxu0
    %2119 = vmatprep.mubr.f32.mxu0 %v1923
    %2120 = vmatmul.mubr.f32.gmra.mxu0 %v1837
    %v2121 = vpop.f32.mrf.mxu0
    %v2122 = vadd.f32 %v2017, %v2121
    %v2123 = vpop.f32.mrf.mxu0
    %2124 = vmatprep.mubr.f32.mxu0 %v1926
    %2125 = vmatmul.mubr.f32.gmra.mxu0 %v1841
    %v2126 = vpop.f32.mrf.mxu0
    %v2127 = vadd.f32 %v2022, %v2126
    %v2128 = vpop.f32.mrf.mxu0
    %2129 = vmatprep.mubr.f32.mxu0 %v1929
    %2130 = vmatmul.mubr.f32.gmra.mxu0 %v1845
    %v2131 = vpop.f32.mrf.mxu0
    %v2132 = vadd.f32 %v2027, %v2131
    %v2133 = vpop.f32.mrf.mxu0
    %2134 = vmatprep.mubr.f32.mxu0 %v1932
    %2135 = vmatmul.mubr.f32.gmra.mxu0 %v1849
    %v2136 = vpop.f32.mrf.mxu0
    %v2137 = vadd.f32 %v2032, %v2136
    %v2138 = vpop.f32.mrf.mxu0
    %2139 = vmatprep.mubr.f32.mxu0 %v1935
    %2140 = vmatmul.mubr.f32.gmra.mxu0 %v1853
    %v2141 = vpop.f32.mrf.mxu0
    %v2142 = vadd.f32 %v2037, %v2141
    %v2143 = vpop.f32.mrf.mxu0
    %2144 = vmatprep.mubr.f32.mxu0 %v1938
    %2145 = vmatmul.mubr.f32.gmra.mxu0 %v1857
    %v2146 = vpop.f32.mrf.mxu0
    %v2147 = vadd.f32 %v2042, %v2146
    %v2148 = vpop.f32.mrf.mxu0
    %2149 = vdwg.mxu0
    %v2150 = vxor.u32 %v2112, 2147483648
    %v2151 = vxor.u32 %v2117, 2147483648
    %v2152 = vxor.u32 %v2122, 2147483648
    %v2153 = vxor.u32 %v2127, 2147483648
    %v2154 = vxor.u32 %v2132, 2147483648
    %v2155 = vxor.u32 %v2137, 2147483648
    %v2156 = vxor.u32 %v2142, 2147483648
    %v2157 = vxor.u32 %v2147, 2147483648
    %v2158 = vmul.f32 %v2150, 1.442695
    %v2159 = vpow.pop %v2158
    %v2160 = vmul.f32 %v2151, 1.442695
    %v2161 = vpow.pop %v2160
    %v2162 = vmul.f32 %v2152, 1.442695
    %v2163 = vpow.pop %v2162
    %v2164 = vmul.f32 %v2153, 1.442695
    %v2165 = vpow.pop %v2164
    %v2166 = vmul.f32 %v2154, 1.442695
    %v2167 = vpow.pop %v2166
    %v2168 = vmul.f32 %v2155, 1.442695
    %v2169 = vpow.pop %v2168
    %v2170 = vmul.f32 %v2156, 1.442695
    %v2171 = vpow.pop %v2170
    %v2172 = vmul.f32 %v2157, 1.442695
    %v2173 = vpow.pop %v2172
    %v2174 = vadd.f32 %v2159, 1.0
    %v2175 = vadd.f32 %v2161, 1.0
    %v2176 = vadd.f32 %v2163, 1.0
    %v2177 = vadd.f32 %v2165, 1.0
    %v2178 = vadd.f32 %v2167, 1.0
    %v2179 = vadd.f32 %v2169, 1.0
    %v2180 = vadd.f32 %v2171, 1.0
    %v2181 = vadd.f32 %v2173, 1.0
    %v2182 = vrcp.pop %v2174
    %v2183 = vmul.f32 1.0, %v2182
    %v2184 = vrcp.pop %v2175
    %v2185 = vmul.f32 1.0, %v2184
    %v2186 = vrcp.pop %v2176
    %v2187 = vmul.f32 1.0, %v2186
    %v2188 = vrcp.pop %v2177
    %v2189 = vmul.f32 1.0, %v2188
    %v2190 = vrcp.pop %v2178
    %v2191 = vmul.f32 1.0, %v2190
    %v2192 = vrcp.pop %v2179
    %v2193 = vmul.f32 1.0, %v2192
    %v2194 = vrcp.pop %v2180
    %v2195 = vmul.f32 1.0, %v2194
    %v2196 = vrcp.pop %v2181
    %v2197 = vmul.f32 1.0, %v2196
    %vm2198 = vcmask 7168
    %2199 = vst.msk [vmem:[%s9] sm:$0xff] %vm2198, %v2183
    %2200 = vst.msk [vmem:[%s9 + $0x8] sm:$0xff] %vm2198, %v2185
    %2201 = vst.msk [vmem:[%s9 + $0x10] sm:$0xff] %vm2198, %v2187
    %2202 = vst.msk [vmem:[%s9 + $0x18] sm:$0xff] %vm2198, %v2189
    %2203 = vst.msk [vmem:[%s9 + $0x20] sm:$0xff] %vm2198, %v2191
    %2204 = vst.msk [vmem:[%s9 + $0x28] sm:$0xff] %vm2198, %v2193
    %2205 = vst.msk [vmem:[%s9 + $0x30] sm:$0xff] %vm2198, %v2195
    %2206 = vst.msk [vmem:[%s9 + $0x38] sm:$0xff] %vm2198, %v2197
    // Predicated region
    $region46: #{tpu_custom_call.1} parent=1 // pred_check
      _
    $region47: #{tpu_custom_call.1} parent=1 // pred_check_branch
      %2208 = sbr.rel (0) target = $region49
    $region48: #{tpu_custom_call.1} parent=1 // pred_region
      _
    $region49: #{tpu_custom_call.1} parent=1 // pred_fallthru
      _
    // Predicated region
    $region50: #{tpu_custom_call.1} parent=1 // pred_check
      _
    $region51: #{tpu_custom_call.1} parent=1 // pred_check_branch
      %2210 = sbr.rel (0) target = $region53
    $region52: #{tpu_custom_call.1} parent=1 // pred_region
      _
    $region53: #{tpu_custom_call.1} parent=1 // pred_fallthru
      _
    %2211 = vsyncpa [#allocation4], 1
    %2212 = vsyncpa [#allocation6], 1

</llo_original>
